<compile_context>
chip_gen: v6e
topology: v6e:2x2x1
jax: 0.10.0
libtpu: 0.0.40
codegen_flags: <defaults>
</compile_context>

<pallas_src>
import functools

import jax
import jax.numpy as jnp
from jax import lax
from jax.experimental import pallas as pl
from jax.experimental.pallas import tpu as pltpu

HIDDEN1 = 100   # logical (PyTorch) hidden sizes
HIDDEN2 = 50

_H1_PAD = 128   # hardware-friendly padded hidden sizes
_H2_PAD = 128
_LANE = 128
_SUBLANE = 8


def _round_up(n, m):
    return ((n + m - 1) // m) * m


def _pad2d(a, shape):
    return jnp.pad(a, ((0, shape[0] - a.shape[0]), (0, shape[1] - a.shape[1])))


def mlp_kernel(x_ref, w1_ref, b1_ref, w2_ref, b2_ref, w3_ref, b3_ref, o_ref,
               *, precision):
    # fc1 + ReLU  (MXU matmul, f32 accumulate; bias/ReLU on VPU in f32)
    h1 = jnp.dot(x_ref[...], w1_ref[...],
                 preferred_element_type=jnp.float32, precision=precision)
    h1 = jnp.maximum(h1 + b1_ref[...], 0.0)
    # fc2 + ReLU
    h2 = jnp.dot(h1.astype(w2_ref.dtype), w2_ref[...],
                 preferred_element_type=jnp.float32, precision=precision)
    h2 = jnp.maximum(h2 + b2_ref[...], 0.0)
    # fc3 (no activation); lane-dense 128-wide store
    h3 = jnp.dot(h2.astype(w3_ref.dtype), w3_ref[...],
                 preferred_element_type=jnp.float32, precision=precision)
    o_ref[...] = (h3 + b3_ref[...]).astype(o_ref.dtype)


@functools.partial(jax.jit, static_argnames=("batch_tile", "matmul_dtype"))
def peak_predictor_forward(x, params, *, batch_tile=None,
                           matmul_dtype=jnp.bfloat16):
    """Fused 3-layer MLP forward.  x: (B, input_size) f32 -> (B, output_size) f32."""
    w1, b1, w2, b2, w3, b3 = params           # w: (in, out) == W_pytorch.T, b: (out,)
    B, in_size = x.shape
    out_size = w3.shape[1]

    # --- padded problem sizes ------------------------------------------------
    K = _round_up(in_size, _LANE)
    N = _round_up(out_size, _LANE)

    if batch_tile is None:
        batch_tile = min(512, _round_up(B, _SUBLANE))
    batch_tile = _round_up(batch_tile, _SUBLANE)
    grid_b = pl.cdiv(B, batch_tile)
    B_pad = grid_b * batch_tile

    # --- pad & cast operands ---------------------------------------------------
    x_p = _pad2d(x.astype(jnp.float32), (B_pad, K)).astype(matmul_dtype)

    w1_p = _pad2d(w1.astype(jnp.float32), (K, _H1_PAD)).astype(matmul_dtype)
    w2_p = _pad2d(w2.astype(jnp.float32), (_H1_PAD, _H2_PAD)).astype(matmul_dtype)
    w3_p = _pad2d(w3.astype(jnp.float32), (_H2_PAD, N)).astype(matmul_dtype)
    b1_p = _pad2d(b1.reshape(1, -1).astype(jnp.float32), (1, _H1_PAD))
    b2_p = _pad2d(b2.reshape(1, -1).astype(jnp.float32), (1, _H2_PAD))
    b3_p = _pad2d(b3.reshape(1, -1).astype(jnp.float32), (1, N))

    # f32-matmul path uses HIGHEST precision so it matches the f32 reference.
    precision = (lax.Precision.HIGHEST if matmul_dtype == jnp.float32
                 else lax.Precision.DEFAULT)
    kernel = functools.partial(mlp_kernel, precision=precision)

    # --- BlockSpecs: tile batch, keep weights/biases resident in VMEM ---------
    in_specs = [
        pl.BlockSpec((batch_tile, K), lambda i: (i, 0)),
        pl.BlockSpec((K, _H1_PAD), lambda i: (0, 0)),
        pl.BlockSpec((1, _H1_PAD), lambda i: (0, 0)),
        pl.BlockSpec((_H1_PAD, _H2_PAD), lambda i: (0, 0)),
        pl.BlockSpec((1, _H2_PAD), lambda i: (0, 0)),
        pl.BlockSpec((_H2_PAD, N), lambda i: (0, 0)),
        pl.BlockSpec((1, N), lambda i: (0, 0)),
    ]
    out_spec = pl.BlockSpec((batch_tile, N), lambda i: (i, 0))

    out_padded = pl.pallas_call(
        kernel,
        out_shape=jax.ShapeDtypeStruct((B_pad, N), jnp.float32),
        grid_spec=pltpu.PrefetchScalarGridSpec(
            num_scalar_prefetch=0,
            grid=(grid_b,),
            in_specs=in_specs,
            out_specs=out_spec,
        ),
        compiler_params=pltpu.CompilerParams(
            dimension_semantics=("parallel",),
            vmem_limit_bytes=32 * 1024 * 1024,   # safe on v7x's smaller VMEM
        ),
    )(x_p, w1_p, b1_p, w2_p, b2_p, w3_p, b3_p)

    # lane-dense padded result -> logical shape
    return out_padded[:B, :out_size]


def init_params(key, input_size, output_size, dtype=jnp.float32):
    """Deterministic synthetic parameters (shapes match the nn.Module)."""
    ks = jax.random.split(key, 6)
    # stored as (in, out) == W_pytorch.T; biases as (out,)
    w1 = jax.random.normal(ks[0], (input_size, HIDDEN1), dtype) * 0.1
    b1 = jax.random.normal(ks[1], (HIDDEN1,), dtype) * 0.1
    w2 = jax.random.normal(ks[2], (HIDDEN1, HIDDEN2), dtype) * 0.1
    b2 = jax.random.normal(ks[3], (HIDDEN2,), dtype) * 0.1
    w3 = jax.random.normal(ks[4], (HIDDEN2, output_size), dtype) * 0.1
    b3 = jax.random.normal(ks[5], (output_size,), dtype) * 0.1
    return (w1, b1, w2, b2, w3, b3)


def reference_forward(x, params):
    w1, b1, w2, b2, w3, b3 = params
    h = jnp.maximum(x @ w1 + b1, 0.0)
    h = jnp.maximum(h @ w2 + b2, 0.0)
    return h @ w3 + b3


if __name__ == "__main__":
    key = jax.random.PRNGKey(0)
    k_x, k_p, k_x2, k_p2 = jax.random.split(key, 4)

    # --- small, "nice" shapes -------------------------------------------------
    batch, input_size, output_size = 8, 32, 4
    x = jax.random.normal(k_x, (batch, input_size), jnp.float32)
    params = init_params(k_p, input_size, output_size)
    ref = reference_forward(x, params)

    out_f32 = jax.block_until_ready(
        peak_predictor_forward(x, params, matmul_dtype=jnp.float32))
    assert out_f32.shape == (batch, output_size)
    assert jnp.allclose(out_f32, ref, atol=1e-4, rtol=1e-4), "f32 path mismatch"

    out_bf16 = jax.block_until_ready(peak_predictor_forward(x, params))
    assert out_bf16.shape == (batch, output_size)
    assert jnp.allclose(out_bf16, ref, atol=5e-2, rtol=5e-2), "bf16 path mismatch"

    # --- odd shapes: exercises row/lane padding and multi-tile grid ------------
    batch2, input_size2, output_size2 = 300, 37, 5
    x2 = jax.random.normal(k_x2, (batch2, input_size2), jnp.float32)
    params2 = init_params(k_p2, input_size2, output_size2)
    ref2 = reference_forward(x2, params2)

    out2_f32 = jax.block_until_ready(
        peak_predictor_forward(x2, params2, batch_tile=128,
                               matmul_dtype=jnp.float32))
    assert out2_f32.shape == (batch2, output_size2)
    assert jnp.allclose(out2_f32, ref2, atol=1e-4, rtol=1e-4), "padded f32 mismatch"

    out2_bf16 = jax.block_until_ready(
        peak_predictor_forward(x2, params2, batch_tile=128))
    assert out2_bf16.shape == (batch2, output_size2)
    assert jnp.allclose(out2_bf16, ref2, atol=1e-1, rtol=1e-1), "padded bf16 mismatch"

    print("KERNEL_OK")
</pallas_src>

<mosaic_0001>
module attributes {stable_mosaic.version = 11 : i64} {
  func.func @mlp_kernel(%arg0: i32, %arg1: memref<8x128xf32, #tpu.memory_space<vmem>>, %arg2: memref<128x128xf32, #tpu.memory_space<vmem>>, %arg3: memref<1x128xf32, #tpu.memory_space<vmem>>, %arg4: memref<128x128xf32, #tpu.memory_space<vmem>>, %arg5: memref<1x128xf32, #tpu.memory_space<vmem>>, %arg6: memref<128x128xf32, #tpu.memory_space<vmem>>, %arg7: memref<1x128xf32, #tpu.memory_space<vmem>>, %arg8: memref<8x128xf32, #tpu.memory_space<vmem>>) attributes {dimension_semantics = [#tpu.dimension_semantics<parallel>], iteration_bounds = array<i64: 1>, scalar_prefetch = 0 : i64, scratch_operands = 0 : i64, tpu.core_type = #tpu.core_type<tc>, window_params = [{transform_indices = @transform_0, window_bounds = array<i64: 8, 128>}, {pipeline_mode = #tpu.pipeline_mode<synchronous>, transform_indices = @transform_1, window_bounds = array<i64: 128, 128>}, {pipeline_mode = #tpu.pipeline_mode<synchronous>, transform_indices = @transform_2, window_bounds = array<i64: 1, 128>}, {pipeline_mode = #tpu.pipeline_mode<synchronous>, transform_indices = @transform_3, window_bounds = array<i64: 128, 128>}, {pipeline_mode = #tpu.pipeline_mode<synchronous>, transform_indices = @transform_4, window_bounds = array<i64: 1, 128>}, {pipeline_mode = #tpu.pipeline_mode<synchronous>, transform_indices = @transform_5, window_bounds = array<i64: 128, 128>}, {pipeline_mode = #tpu.pipeline_mode<synchronous>, transform_indices = @transform_6, window_bounds = array<i64: 1, 128>}, {transform_indices = @transform_7, window_bounds = array<i64: 8, 128>}]} {
    %c0 = arith.constant 0 : index
    %c0_0 = arith.constant 0 : index
    %0 = vector.load %arg1[%c0, %c0_0] : memref<8x128xf32, #tpu.memory_space<vmem>>, vector<8x128xf32>
    %c0_1 = arith.constant 0 : index
    %c0_2 = arith.constant 0 : index
    %1 = vector.load %arg2[%c0_1, %c0_2] : memref<128x128xf32, #tpu.memory_space<vmem>>, vector<128x128xf32>
    %cst = arith.constant dense<0.000000e+00> : vector<8x128xf32>
    %2 = tpu.matmul %0, %1, %cst {dimension_numbers = #tpu.dot_dimension_numbers<[1], [0], [0], [1], [0, 0, 1, 1], [], []>, precision = #tpu.contract_precision<fp32>} : vector<8x128xf32>, vector<128x128xf32>, vector<8x128xf32> -> vector<8x128xf32>
    %c0_3 = arith.constant 0 : index
    %c0_4 = arith.constant 0 : index
    %3 = vector.load %arg3[%c0_3, %c0_4] : memref<1x128xf32, #tpu.memory_space<vmem>>, vector<1x128xf32>
    %4 = vector.broadcast %3 : vector<1x128xf32> to vector<8x128xf32>
    %5 = arith.addf %2, %4 : vector<8x128xf32>
    %cst_5 = arith.constant 0.000000e+00 : f32
    %6 = vector.broadcast %cst_5 : f32 to vector<8x128xf32>
    %7 = arith.maximumf %5, %6 : vector<8x128xf32>
    %c0_6 = arith.constant 0 : index
    %c0_7 = arith.constant 0 : index
    %8 = vector.load %arg4[%c0_6, %c0_7] : memref<128x128xf32, #tpu.memory_space<vmem>>, vector<128x128xf32>
    %cst_8 = arith.constant dense<0.000000e+00> : vector<8x128xf32>
    %9 = tpu.matmul %7, %8, %cst_8 {dimension_numbers = #tpu.dot_dimension_numbers<[1], [0], [0], [1], [0, 0, 1, 1], [], []>, precision = #tpu.contract_precision<fp32>} : vector<8x128xf32>, vector<128x128xf32>, vector<8x128xf32> -> vector<8x128xf32>
    %c0_9 = arith.constant 0 : index
    %c0_10 = arith.constant 0 : index
    %10 = vector.load %arg5[%c0_9, %c0_10] : memref<1x128xf32, #tpu.memory_space<vmem>>, vector<1x128xf32>
    %11 = vector.broadcast %10 : vector<1x128xf32> to vector<8x128xf32>
    %12 = arith.addf %9, %11 : vector<8x128xf32>
    %cst_11 = arith.constant 0.000000e+00 : f32
    %13 = vector.broadcast %cst_11 : f32 to vector<8x128xf32>
    %14 = arith.maximumf %12, %13 : vector<8x128xf32>
    %c0_12 = arith.constant 0 : index
    %c0_13 = arith.constant 0 : index
    %15 = vector.load %arg6[%c0_12, %c0_13] : memref<128x128xf32, #tpu.memory_space<vmem>>, vector<128x128xf32>
    %cst_14 = arith.constant dense<0.000000e+00> : vector<8x128xf32>
    %16 = tpu.matmul %14, %15, %cst_14 {dimension_numbers = #tpu.dot_dimension_numbers<[1], [0], [0], [1], [0, 0, 1, 1], [], []>, precision = #tpu.contract_precision<fp32>} : vector<8x128xf32>, vector<128x128xf32>, vector<8x128xf32> -> vector<8x128xf32>
    %c0_15 = arith.constant 0 : index
    %c0_16 = arith.constant 0 : index
    %17 = vector.load %arg7[%c0_15, %c0_16] : memref<1x128xf32, #tpu.memory_space<vmem>>, vector<1x128xf32>
    %18 = vector.broadcast %17 : vector<1x128xf32> to vector<8x128xf32>
    %19 = arith.addf %16, %18 : vector<8x128xf32>
    %c0_17 = arith.constant 0 : index
    %c0_18 = arith.constant 0 : index
    %20 = vector.load %arg8[%c0_17, %c0_18] : memref<8x128xf32, #tpu.memory_space<vmem>>, vector<8x128xf32>
    tpu.vector_store %arg8[%c0_17, %c0_18], %19 {strides = array<i32>} : memref<8x128xf32, #tpu.memory_space<vmem>>, vector<8x128xf32>,
    return
  }
  func.func @transform_0(%arg0: i32) -> (i32, i32) {
    %c0_i32 = arith.constant 0 : i32
    %c0_i32_0 = arith.constant 0 : i32
    return %arg0, %c0_i32 : i32, i32
  }
  func.func @transform_1(%arg0: i32) -> (i32, i32) {
    %c0_i32 = arith.constant 0 : i32
    %c0_i32_0 = arith.constant 0 : i32
    %c0_i32_1 = arith.constant 0 : i32
    return %c0_i32, %c0_i32_0 : i32, i32
  }
  func.func @transform_2(%arg0: i32) -> (i32, i32) {
    %c0_i32 = arith.constant 0 : i32
    %c0_i32_0 = arith.constant 0 : i32
    %c0_i32_1 = arith.constant 0 : i32
    return %c0_i32, %c0_i32_0 : i32, i32
  }
  func.func @transform_3(%arg0: i32) -> (i32, i32) {
    %c0_i32 = arith.constant 0 : i32
    %c0_i32_0 = arith.constant 0 : i32
    %c0_i32_1 = arith.constant 0 : i32
    return %c0_i32, %c0_i32_0 : i32, i32
  }
  func.func @transform_4(%arg0: i32) -> (i32, i32) {
    %c0_i32 = arith.constant 0 : i32
    %c0_i32_0 = arith.constant 0 : i32
    %c0_i32_1 = arith.constant 0 : i32
    return %c0_i32, %c0_i32_0 : i32, i32
  }
  func.func @transform_5(%arg0: i32) -> (i32, i32) {
    %c0_i32 = arith.constant 0 : i32
    %c0_i32_0 = arith.constant 0 : i32
    %c0_i32_1 = arith.constant 0 : i32
    return %c0_i32, %c0_i32_0 : i32, i32
  }
  func.func @transform_6(%arg0: i32) -> (i32, i32) {
    %c0_i32 = arith.constant 0 : i32
    %c0_i32_0 = arith.constant 0 : i32
    %c0_i32_1 = arith.constant 0 : i32
    return %c0_i32, %c0_i32_0 : i32, i32
  }
  func.func @transform_7(%arg0: i32) -> (i32, i32) {
    %c0_i32 = arith.constant 0 : i32
    %c0_i32_0 = arith.constant 0 : i32
    return %arg0, %c0_i32 : i32, i32
  }
}

</mosaic_0001>

<llo_original>
// kernel: peak_predictor_forward.1
$region0: #{peak_predictor_forward.1}
  #allocation0 [shape = 'u32[]', space=smem, size = 0x4, offset = 0x4, fixed_abs, tag = 'smem constant byte address 0x4 - core index']
  #allocation1 [shape = 'u32[144,128]{1,0:T(1,128)}', space=vmem, size = 0x12000, scoped, tag = 'internal scratch']
  %s0 = inlined_call_operand.vmem [shape: f32[8,128], index: 0, kind: input, shape index: {}]
  %s1 = inlined_call_operand.vmem [shape: f32[128,128], index: 1, kind: input, shape index: {}]
  %s2 = inlined_call_operand.vmem [shape: f32[1,128], index: 2, kind: input, shape index: {}]
  %s3 = inlined_call_operand.vmem [shape: f32[128,128], index: 3, kind: input, shape index: {}]
  %s4 = inlined_call_operand.vmem [shape: f32[1,128], index: 4, kind: input, shape index: {}]
  %s5 = inlined_call_operand.vmem [shape: f32[128,128], index: 5, kind: input, shape index: {}]
  %s6 = inlined_call_operand.vmem [shape: f32[1,128], index: 6, kind: input, shape index: {}]
  %s7 = inlined_call_operand.vmem [shape: f32[8,128], index: 7, kind: output, shape index: {}]
  %s8 = sld [smem:[#allocation0]]
  $region38: #{peak_predictor_forward.1} parent=0
    _
  %s10 = ssub.s32 1, %s8
  %s11 = scalar_select 0, %s10, %s8
  // Predicated region
  $region2: #{peak_predictor_forward.1} parent=0 // pred_check
    _
  $region3: #{peak_predictor_forward.1} parent=0 // pred_check_branch
    %13 = sbr.rel (0) target = $region5
  $region4: #{peak_predictor_forward.1} parent=0 // pred_region
    _
  $region5: #{peak_predictor_forward.1} parent=0 // pred_fallthru
    _
  // Predicated region
  $region6: #{peak_predictor_forward.1} parent=0 // pred_check
    _
  $region7: #{peak_predictor_forward.1} parent=0 // pred_check_branch
    %15 = sbr.rel (0) target = $region9
  $region8: #{peak_predictor_forward.1} parent=0 // pred_region
    _
  $region9: #{peak_predictor_forward.1} parent=0 // pred_fallthru
    _
  // Predicated region
  $region10: #{peak_predictor_forward.1} parent=0 // pred_check
    _
  $region11: #{peak_predictor_forward.1} parent=0 // pred_check_branch
    %17 = sbr.rel (0) target = $region13
  $region12: #{peak_predictor_forward.1} parent=0 // pred_region
    _
  $region13: #{peak_predictor_forward.1} parent=0 // pred_fallthru
    _
  // Predicated region
  $region14: #{peak_predictor_forward.1} parent=0 // pred_check
    _
  $region15: #{peak_predictor_forward.1} parent=0 // pred_check_branch
    %19 = sbr.rel (0) target = $region17
  $region16: #{peak_predictor_forward.1} parent=0 // pred_region
    _
  $region17: #{peak_predictor_forward.1} parent=0 // pred_fallthru
    _
  // Predicated region
  $region18: #{peak_predictor_forward.1} parent=0 // pred_check
    _
  $region19: #{peak_predictor_forward.1} parent=0 // pred_check_branch
    %21 = sbr.rel (0) target = $region21
  $region20: #{peak_predictor_forward.1} parent=0 // pred_region
    _
  $region21: #{peak_predictor_forward.1} parent=0 // pred_fallthru
    _
  // Predicated region
  $region22: #{peak_predictor_forward.1} parent=0 // pred_check
    _
  $region23: #{peak_predictor_forward.1} parent=0 // pred_check_branch
    %23 = sbr.rel (0) target = $region25
  $region24: #{peak_predictor_forward.1} parent=0 // pred_region
    _
  $region25: #{peak_predictor_forward.1} parent=0 // pred_fallthru
    _
  // Predicated region
  $region26: #{peak_predictor_forward.1} parent=0 // pred_check
    _
  $region27: #{peak_predictor_forward.1} parent=0 // pred_check_branch
    %25 = sbr.rel (0) target = $region29
  $region28: #{peak_predictor_forward.1} parent=0 // pred_region
    _
  $region29: #{peak_predictor_forward.1} parent=0 // pred_fallthru
    _
  %v26 = vld [vmem:[%s0] sm:$0xff]
  %v27 = vld [vmem:[%s1] sm:$0xff]
  %v28 = vld [vmem:[%s1 + $0x8] sm:$0xff]
  %v29 = vld [vmem:[%s1 + $0x10] sm:$0xff]
  %v30 = vld [vmem:[%s1 + $0x18] sm:$0xff]
  %v31 = vld [vmem:[%s1 + $0x20] sm:$0xff]
  %v32 = vld [vmem:[%s1 + $0x28] sm:$0xff]
  %v33 = vld [vmem:[%s1 + $0x30] sm:$0xff]
  %v34 = vld [vmem:[%s1 + $0x38] sm:$0xff]
  %v35 = vld [vmem:[%s1 + $0x40] sm:$0xff]
  %v36 = vld [vmem:[%s1 + $0x48] sm:$0xff]
  %v37 = vld [vmem:[%s1 + $0x50] sm:$0xff]
  %v38 = vld [vmem:[%s1 + $0x58] sm:$0xff]
  %v39 = vld [vmem:[%s1 + $0x60] sm:$0xff]
  %v40 = vld [vmem:[%s1 + $0x68] sm:$0xff]
  %v41 = vld [vmem:[%s1 + $0x70] sm:$0xff]
  %v42 = vld [vmem:[%s1 + $0x78] sm:$0xff]
  %v43 = vld [vmem:[%s2] sm:$0x1]
  %v45 = vlaneseq
  %v46 = vshrl.u32 %v45, 7
  %v47 = vsub.s32 0, %v46
  %v48 = vrot.slane %v43, %v47
  %50 = vmatprep.subr.mxu0 0.0
  %v51 = vand.u32 %v42, 4294901760
  %52 = vmatpush1.msra.mxu0 %v51
  %53 = vmatprep.subr.mxu0 0.0
  %v54 = vand.u32 %v41, 4294901760
  %55 = vmatpush1.msra.mxu0 %v54
  %56 = vmatprep.subr.mxu0 0.0
  %v57 = vand.u32 %v40, 4294901760
  %58 = vmatpush1.msra.mxu0 %v57
  %59 = vmatprep.subr.mxu0 0.0
  %v60 = vand.u32 %v39, 4294901760
  %61 = vmatpush1.msra.mxu0 %v60
  %62 = vmatprep.subr.mxu0 0.0
  %v63 = vand.u32 %v38, 4294901760
  %64 = vmatpush1.msra.mxu0 %v63
  %65 = vmatprep.subr.mxu0 0.0
  %v66 = vand.u32 %v37, 4294901760
  %67 = vmatpush1.msra.mxu0 %v66
  %68 = vmatprep.subr.mxu0 0.0
  %v69 = vand.u32 %v36, 4294901760
  %70 = vmatpush1.msra.mxu0 %v69
  %71 = vmatprep.subr.mxu0 0.0
  %v72 = vand.u32 %v35, 4294901760
  %73 = vmatpush1.msra.mxu0 %v72
  %74 = vmatprep.subr.mxu0 0.0
  %v75 = vand.u32 %v34, 4294901760
  %76 = vmatpush1.msra.mxu0 %v75
  %77 = vmatprep.subr.mxu0 0.0
  %v78 = vand.u32 %v33, 4294901760
  %79 = vmatpush1.msra.mxu0 %v78
  %80 = vmatprep.subr.mxu0 0.0
  %v81 = vand.u32 %v32, 4294901760
  %82 = vmatpush1.msra.mxu0 %v81
  %83 = vmatprep.subr.mxu0 0.0
  %v84 = vand.u32 %v31, 4294901760
  %85 = vmatpush1.msra.mxu0 %v84
  %86 = vmatprep.subr.mxu0 0.0
  %v87 = vand.u32 %v30, 4294901760
  %88 = vmatpush1.msra.mxu0 %v87
  %89 = vmatprep.subr.mxu0 0.0
  %v90 = vand.u32 %v29, 4294901760
  %91 = vmatpush1.msra.mxu0 %v90
  %92 = vmatprep.subr.mxu0 0.0
  %v93 = vand.u32 %v28, 4294901760
  %94 = vmatpush1.msra.mxu0 %v93
  %95 = vmatprep.subr.mxu0 0.0
  %v96 = vand.u32 %v27, 4294901760
  %97 = vmatpush1.msra.mxu0 %v96
  %98 = vmatprep.subr.mxu0 0.0
  %99 = vmatpush2.msra.mxu0 0.0
  %100 = vmatprep.subr.mxu0 0.0
  %101 = vmatpush2.msra.mxu0 0.0
  %102 = vmatprep.subr.mxu0 0.0
  %103 = vmatpush2.msra.mxu0 0.0
  %104 = vmatprep.subr.mxu0 0.0
  %105 = vmatpush2.msra.mxu0 0.0
  %106 = vmatprep.subr.mxu0 0.0
  %107 = vmatpush2.msra.mxu0 0.0
  %108 = vmatprep.subr.mxu0 0.0
  %109 = vmatpush2.msra.mxu0 0.0
  %110 = vmatprep.subr.mxu0 0.0
  %111 = vmatpush2.msra.mxu0 0.0
  %112 = vmatprep.subr.mxu0 0.0
  %113 = vmatpush2.msra.mxu0 0.0
  %114 = vmatprep.subr.mxu0 0.0
  %115 = vmatpush2.msra.mxu0 0.0
  %116 = vmatprep.subr.mxu0 0.0
  %117 = vmatpush2.msra.mxu0 0.0
  %118 = vmatprep.subr.mxu0 0.0
  %119 = vmatpush2.msra.mxu0 0.0
  %120 = vmatprep.subr.mxu0 0.0
  %121 = vmatpush2.msra.mxu0 0.0
  %122 = vmatprep.subr.mxu0 0.0
  %123 = vmatpush2.msra.mxu0 0.0
  %124 = vmatprep.subr.mxu0 0.0
  %125 = vmatpush2.msra.mxu0 0.0
  %126 = vmatprep.subr.mxu0 0.0
  %127 = vmatpush2.msra.mxu0 0.0
  %128 = vmatprep.subr.mxu0 0.0
  %129 = vmatpush2.msra.mxu0 0.0
  %130 = vmatprep.mubr.f32.mxu0 0.0
  %v131 = vand.u32 %v26, 4294901760
  %v132 = vsub.f32 %v26, %v131
  %v133 = vand.u32 %v132, 4294901760
  %v134 = vsub.f32 %v132, %v133
  %v135 = vand.u32 %v134, 4294901760
  %136 = vmatmul.mubr.f32.gmra.mxu0 %v135
  %v137 = vpop.f32.mrf.mxu0
  %v138 = vadd.f32 %v48, %v137
  %v139 = vpop.f32.mrf.mxu0
  %140 = vdwg.mxu0
  %141 = vmatprep.subr.mxu0 0.0
  %v142 = vand.u32 %v42, 4294901760
  %v143 = vsub.f32 %v42, %v142
  %v144 = vand.u32 %v143, 4294901760
  %v145 = vsub.f32 %v143, %v144
  %v146 = vand.u32 %v145, 4294901760
  %147 = vmatpush1.msra.mxu0 %v146
  %148 = vmatprep.subr.mxu0 0.0
  %v149 = vand.u32 %v41, 4294901760
  %v150 = vsub.f32 %v41, %v149
  %v151 = vand.u32 %v150, 4294901760
  %v152 = vsub.f32 %v150, %v151
  %v153 = vand.u32 %v152, 4294901760
  %154 = vmatpush1.msra.mxu0 %v153
  %155 = vmatprep.subr.mxu0 0.0
  %v156 = vand.u32 %v40, 4294901760
  %v157 = vsub.f32 %v40, %v156
  %v158 = vand.u32 %v157, 4294901760
  %v159 = vsub.f32 %v157, %v158
  %v160 = vand.u32 %v159, 4294901760
  %161 = vmatpush1.msra.mxu0 %v160
  %162 = vmatprep.subr.mxu0 0.0
  %v163 = vand.u32 %v39, 4294901760
  %v164 = vsub.f32 %v39, %v163
  %v165 = vand.u32 %v164, 4294901760
  %v166 = vsub.f32 %v164, %v165
  %v167 = vand.u32 %v166, 4294901760
  %168 = vmatpush1.msra.mxu0 %v167
  %169 = vmatprep.subr.mxu0 0.0
  %v170 = vand.u32 %v38, 4294901760
  %v171 = vsub.f32 %v38, %v170
  %v172 = vand.u32 %v171, 4294901760
  %v173 = vsub.f32 %v171, %v172
  %v174 = vand.u32 %v173, 4294901760
  %175 = vmatpush1.msra.mxu0 %v174
  %176 = vmatprep.subr.mxu0 0.0
  %v177 = vand.u32 %v37, 4294901760
  %v178 = vsub.f32 %v37, %v177
  %v179 = vand.u32 %v178, 4294901760
  %v180 = vsub.f32 %v178, %v179
  %v181 = vand.u32 %v180, 4294901760
  %182 = vmatpush1.msra.mxu0 %v181
  %183 = vmatprep.subr.mxu0 0.0
  %v184 = vand.u32 %v36, 4294901760
  %v185 = vsub.f32 %v36, %v184
  %v186 = vand.u32 %v185, 4294901760
  %v187 = vsub.f32 %v185, %v186
  %v188 = vand.u32 %v187, 4294901760
  %189 = vmatpush1.msra.mxu0 %v188
  %190 = vmatprep.subr.mxu0 0.0
  %v191 = vand.u32 %v35, 4294901760
  %v192 = vsub.f32 %v35, %v191
  %v193 = vand.u32 %v192, 4294901760
  %v194 = vsub.f32 %v192, %v193
  %v195 = vand.u32 %v194, 4294901760
  %196 = vmatpush1.msra.mxu0 %v195
  %197 = vmatprep.subr.mxu0 0.0
  %v198 = vand.u32 %v34, 4294901760
  %v199 = vsub.f32 %v34, %v198
  %v200 = vand.u32 %v199, 4294901760
  %v201 = vsub.f32 %v199, %v200
  %v202 = vand.u32 %v201, 4294901760
  %203 = vmatpush1.msra.mxu0 %v202
  %204 = vmatprep.subr.mxu0 0.0
  %v205 = vand.u32 %v33, 4294901760
  %v206 = vsub.f32 %v33, %v205
  %v207 = vand.u32 %v206, 4294901760
  %v208 = vsub.f32 %v206, %v207
  %v209 = vand.u32 %v208, 4294901760
  %210 = vmatpush1.msra.mxu0 %v209
  %211 = vmatprep.subr.mxu0 0.0
  %v212 = vand.u32 %v32, 4294901760
  %v213 = vsub.f32 %v32, %v212
  %v214 = vand.u32 %v213, 4294901760
  %v215 = vsub.f32 %v213, %v214
  %v216 = vand.u32 %v215, 4294901760
  %217 = vmatpush1.msra.mxu0 %v216
  %218 = vmatprep.subr.mxu0 0.0
  %v219 = vand.u32 %v31, 4294901760
  %v220 = vsub.f32 %v31, %v219
  %v221 = vand.u32 %v220, 4294901760
  %v222 = vsub.f32 %v220, %v221
  %v223 = vand.u32 %v222, 4294901760
  %224 = vmatpush1.msra.mxu0 %v223
  %225 = vmatprep.subr.mxu0 0.0
  %v226 = vand.u32 %v30, 4294901760
  %v227 = vsub.f32 %v30, %v226
  %v228 = vand.u32 %v227, 4294901760
  %v229 = vsub.f32 %v227, %v228
  %v230 = vand.u32 %v229, 4294901760
  %231 = vmatpush1.msra.mxu0 %v230
  %232 = vmatprep.subr.mxu0 0.0
  %v233 = vand.u32 %v29, 4294901760
  %v234 = vsub.f32 %v29, %v233
  %v235 = vand.u32 %v234, 4294901760
  %v236 = vsub.f32 %v234, %v235
  %v237 = vand.u32 %v236, 4294901760
  %238 = vmatpush1.msra.mxu0 %v237
  %239 = vmatprep.subr.mxu0 0.0
  %v240 = vand.u32 %v28, 4294901760
  %v241 = vsub.f32 %v28, %v240
  %v242 = vand.u32 %v241, 4294901760
  %v243 = vsub.f32 %v241, %v242
  %v244 = vand.u32 %v243, 4294901760
  %245 = vmatpush1.msra.mxu0 %v244
  %246 = vmatprep.subr.mxu0 0.0
  %v247 = vand.u32 %v27, 4294901760
  %v248 = vsub.f32 %v27, %v247
  %v249 = vand.u32 %v248, 4294901760
  %v250 = vsub.f32 %v248, %v249
  %v251 = vand.u32 %v250, 4294901760
  %252 = vmatpush1.msra.mxu0 %v251
  %253 = vmatprep.subr.mxu0 0.0
  %254 = vmatpush2.msra.mxu0 0.0
  %255 = vmatprep.subr.mxu0 0.0
  %256 = vmatpush2.msra.mxu0 0.0
  %257 = vmatprep.subr.mxu0 0.0
  %258 = vmatpush2.msra.mxu0 0.0
  %259 = vmatprep.subr.mxu0 0.0
  %260 = vmatpush2.msra.mxu0 0.0
  %261 = vmatprep.subr.mxu0 0.0
  %262 = vmatpush2.msra.mxu0 0.0
  %263 = vmatprep.subr.mxu0 0.0
  %264 = vmatpush2.msra.mxu0 0.0
  %265 = vmatprep.subr.mxu0 0.0
  %266 = vmatpush2.msra.mxu0 0.0
  %267 = vmatprep.subr.mxu0 0.0
  %268 = vmatpush2.msra.mxu0 0.0
  %269 = vmatprep.subr.mxu0 0.0
  %270 = vmatpush2.msra.mxu0 0.0
  %271 = vmatprep.subr.mxu0 0.0
  %272 = vmatpush2.msra.mxu0 0.0
  %273 = vmatprep.subr.mxu0 0.0
  %274 = vmatpush2.msra.mxu0 0.0
  %275 = vmatprep.subr.mxu0 0.0
  %276 = vmatpush2.msra.mxu0 0.0
  %277 = vmatprep.subr.mxu0 0.0
  %278 = vmatpush2.msra.mxu0 0.0
  %279 = vmatprep.subr.mxu0 0.0
  %280 = vmatpush2.msra.mxu0 0.0
  %281 = vmatprep.subr.mxu0 0.0
  %282 = vmatpush2.msra.mxu0 0.0
  %283 = vmatprep.subr.mxu0 0.0
  %284 = vmatpush2.msra.mxu0 0.0
  %285 = vmatprep.mubr.f32.mxu0 0.0
  %v286 = vand.u32 %v26, 4294901760
  %287 = vmatmul.mubr.f32.gmra.mxu0 %v286
  %v288 = vpop.f32.mrf.mxu0
  %v289 = vadd.f32 %v138, %v288
  %v290 = vpop.f32.mrf.mxu0
  %291 = vdwg.mxu0
  %292 = vmatprep.subr.mxu0 0.0
  %v293 = vand.u32 %v42, 4294901760
  %v294 = vsub.f32 %v42, %v293
  %295 = vmatpush1.msra.mxu0 %v294
  %296 = vmatprep.subr.mxu0 0.0
  %v297 = vand.u32 %v41, 4294901760
  %v298 = vsub.f32 %v41, %v297
  %299 = vmatpush1.msra.mxu0 %v298
  %300 = vmatprep.subr.mxu0 0.0
  %v301 = vand.u32 %v40, 4294901760
  %v302 = vsub.f32 %v40, %v301
  %303 = vmatpush1.msra.mxu0 %v302
  %304 = vmatprep.subr.mxu0 0.0
  %v305 = vand.u32 %v39, 4294901760
  %v306 = vsub.f32 %v39, %v305
  %307 = vmatpush1.msra.mxu0 %v306
  %308 = vmatprep.subr.mxu0 0.0
  %v309 = vand.u32 %v38, 4294901760
  %v310 = vsub.f32 %v38, %v309
  %311 = vmatpush1.msra.mxu0 %v310
  %312 = vmatprep.subr.mxu0 0.0
  %v313 = vand.u32 %v37, 4294901760
  %v314 = vsub.f32 %v37, %v313
  %315 = vmatpush1.msra.mxu0 %v314
  %316 = vmatprep.subr.mxu0 0.0
  %v317 = vand.u32 %v36, 4294901760
  %v318 = vsub.f32 %v36, %v317
  %319 = vmatpush1.msra.mxu0 %v318
  %320 = vmatprep.subr.mxu0 0.0
  %v321 = vand.u32 %v35, 4294901760
  %v322 = vsub.f32 %v35, %v321
  %323 = vmatpush1.msra.mxu0 %v322
  %324 = vmatprep.subr.mxu0 0.0
  %v325 = vand.u32 %v34, 4294901760
  %v326 = vsub.f32 %v34, %v325
  %327 = vmatpush1.msra.mxu0 %v326
  %328 = vmatprep.subr.mxu0 0.0
  %v329 = vand.u32 %v33, 4294901760
  %v330 = vsub.f32 %v33, %v329
  %331 = vmatpush1.msra.mxu0 %v330
  %332 = vmatprep.subr.mxu0 0.0
  %v333 = vand.u32 %v32, 4294901760
  %v334 = vsub.f32 %v32, %v333
  %335 = vmatpush1.msra.mxu0 %v334
  %336 = vmatprep.subr.mxu0 0.0
  %v337 = vand.u32 %v31, 4294901760
  %v338 = vsub.f32 %v31, %v337
  %339 = vmatpush1.msra.mxu0 %v338
  %340 = vmatprep.subr.mxu0 0.0
  %v341 = vand.u32 %v30, 4294901760
  %v342 = vsub.f32 %v30, %v341
  %343 = vmatpush1.msra.mxu0 %v342
  %344 = vmatprep.subr.mxu0 0.0
  %v345 = vand.u32 %v29, 4294901760
  %v346 = vsub.f32 %v29, %v345
  %347 = vmatpush1.msra.mxu0 %v346
  %348 = vmatprep.subr.mxu0 0.0
  %v349 = vand.u32 %v28, 4294901760
  %v350 = vsub.f32 %v28, %v349
  %351 = vmatpush1.msra.mxu0 %v350
  %352 = vmatprep.subr.mxu0 0.0
  %v353 = vand.u32 %v27, 4294901760
  %v354 = vsub.f32 %v27, %v353
  %355 = vmatpush1.msra.mxu0 %v354
  %356 = vmatprep.subr.mxu0 0.0
  %357 = vmatpush2.msra.mxu0 0.0
  %358 = vmatprep.subr.mxu0 0.0
  %359 = vmatpush2.msra.mxu0 0.0
  %360 = vmatprep.subr.mxu0 0.0
  %361 = vmatpush2.msra.mxu0 0.0
  %362 = vmatprep.subr.mxu0 0.0
  %363 = vmatpush2.msra.mxu0 0.0
  %364 = vmatprep.subr.mxu0 0.0
  %365 = vmatpush2.msra.mxu0 0.0
  %366 = vmatprep.subr.mxu0 0.0
  %367 = vmatpush2.msra.mxu0 0.0
  %368 = vmatprep.subr.mxu0 0.0
  %369 = vmatpush2.msra.mxu0 0.0
  %370 = vmatprep.subr.mxu0 0.0
  %371 = vmatpush2.msra.mxu0 0.0
  %372 = vmatprep.subr.mxu0 0.0
  %373 = vmatpush2.msra.mxu0 0.0
  %374 = vmatprep.subr.mxu0 0.0
  %375 = vmatpush2.msra.mxu0 0.0
  %376 = vmatprep.subr.mxu0 0.0
  %377 = vmatpush2.msra.mxu0 0.0
  %378 = vmatprep.subr.mxu0 0.0
  %379 = vmatpush2.msra.mxu0 0.0
  %380 = vmatprep.subr.mxu0 0.0
  %381 = vmatpush2.msra.mxu0 0.0
  %382 = vmatprep.subr.mxu0 0.0
  %383 = vmatpush2.msra.mxu0 0.0
  %384 = vmatprep.subr.mxu0 0.0
  %385 = vmatpush2.msra.mxu0 0.0
  %386 = vmatprep.subr.mxu0 0.0
  %387 = vmatpush2.msra.mxu0 0.0
  %388 = vmatprep.mubr.f32.mxu0 0.0
  %v389 = vand.u32 %v26, 4294901760
  %v390 = vsub.f32 %v26, %v389
  %391 = vmatmul.mubr.f32.gmra.mxu0 %v390
  %v392 = vpop.f32.mrf.mxu0
  %v393 = vadd.f32 %v289, %v392
  %v394 = vpop.f32.mrf.mxu0
  %395 = vdwg.mxu0
  %396 = vmatprep.subr.mxu0 0.0
  %v397 = vand.u32 %v42, 4294901760
  %398 = vmatpush1.msra.mxu0 %v397
  %399 = vmatprep.subr.mxu0 0.0
  %v400 = vand.u32 %v41, 4294901760
  %401 = vmatpush1.msra.mxu0 %v400
  %402 = vmatprep.subr.mxu0 0.0
  %v403 = vand.u32 %v40, 4294901760
  %404 = vmatpush1.msra.mxu0 %v403
  %405 = vmatprep.subr.mxu0 0.0
  %v406 = vand.u32 %v39, 4294901760
  %407 = vmatpush1.msra.mxu0 %v406
  %408 = vmatprep.subr.mxu0 0.0
  %v409 = vand.u32 %v38, 4294901760
  %410 = vmatpush1.msra.mxu0 %v409
  %411 = vmatprep.subr.mxu0 0.0
  %v412 = vand.u32 %v37, 4294901760
  %413 = vmatpush1.msra.mxu0 %v412
  %414 = vmatprep.subr.mxu0 0.0
  %v415 = vand.u32 %v36, 4294901760
  %416 = vmatpush1.msra.mxu0 %v415
  %417 = vmatprep.subr.mxu0 0.0
  %v418 = vand.u32 %v35, 4294901760
  %419 = vmatpush1.msra.mxu0 %v418
  %420 = vmatprep.subr.mxu0 0.0
  %v421 = vand.u32 %v34, 4294901760
  %422 = vmatpush1.msra.mxu0 %v421
  %423 = vmatprep.subr.mxu0 0.0
  %v424 = vand.u32 %v33, 4294901760
  %425 = vmatpush1.msra.mxu0 %v424
  %426 = vmatprep.subr.mxu0 0.0
  %v427 = vand.u32 %v32, 4294901760
  %428 = vmatpush1.msra.mxu0 %v427
  %429 = vmatprep.subr.mxu0 0.0
  %v430 = vand.u32 %v31, 4294901760
  %431 = vmatpush1.msra.mxu0 %v430
  %432 = vmatprep.subr.mxu0 0.0
  %v433 = vand.u32 %v30, 4294901760
  %434 = vmatpush1.msra.mxu0 %v433
  %435 = vmatprep.subr.mxu0 0.0
  %v436 = vand.u32 %v29, 4294901760
  %437 = vmatpush1.msra.mxu0 %v436
  %438 = vmatprep.subr.mxu0 0.0
  %v439 = vand.u32 %v28, 4294901760
  %440 = vmatpush1.msra.mxu0 %v439
  %441 = vmatprep.subr.mxu0 0.0
  %v442 = vand.u32 %v27, 4294901760
  %443 = vmatpush1.msra.mxu0 %v442
  %444 = vmatprep.subr.mxu0 0.0
  %445 = vmatpush2.msra.mxu0 0.0
  %446 = vmatprep.subr.mxu0 0.0
  %447 = vmatpush2.msra.mxu0 0.0
  %448 = vmatprep.subr.mxu0 0.0
  %449 = vmatpush2.msra.mxu0 0.0
  %450 = vmatprep.subr.mxu0 0.0
  %451 = vmatpush2.msra.mxu0 0.0
  %452 = vmatprep.subr.mxu0 0.0
  %453 = vmatpush2.msra.mxu0 0.0
  %454 = vmatprep.subr.mxu0 0.0
  %455 = vmatpush2.msra.mxu0 0.0
  %456 = vmatprep.subr.mxu0 0.0
  %457 = vmatpush2.msra.mxu0 0.0
  %458 = vmatprep.subr.mxu0 0.0
  %459 = vmatpush2.msra.mxu0 0.0
  %460 = vmatprep.subr.mxu0 0.0
  %461 = vmatpush2.msra.mxu0 0.0
  %462 = vmatprep.subr.mxu0 0.0
  %463 = vmatpush2.msra.mxu0 0.0
  %464 = vmatprep.subr.mxu0 0.0
  %465 = vmatpush2.msra.mxu0 0.0
  %466 = vmatprep.subr.mxu0 0.0
  %467 = vmatpush2.msra.mxu0 0.0
  %468 = vmatprep.subr.mxu0 0.0
  %469 = vmatpush2.msra.mxu0 0.0
  %470 = vmatprep.subr.mxu0 0.0
  %471 = vmatpush2.msra.mxu0 0.0
  %472 = vmatprep.subr.mxu0 0.0
  %473 = vmatpush2.msra.mxu0 0.0
  %474 = vmatprep.subr.mxu0 0.0
  %475 = vmatpush2.msra.mxu0 0.0
  %476 = vmatprep.mubr.f32.mxu0 0.0
  %v477 = vand.u32 %v26, 4294901760
  %v478 = vsub.f32 %v26, %v477
  %v479 = vand.u32 %v478, 4294901760
  %480 = vmatmul.mubr.f32.gmra.mxu0 %v479
  %v481 = vpop.f32.mrf.mxu0
  %v482 = vadd.f32 %v393, %v481
  %v483 = vpop.f32.mrf.mxu0
  %484 = vdwg.mxu0
  %485 = vmatprep.subr.mxu0 0.0
  %v486 = vand.u32 %v42, 4294901760
  %v487 = vsub.f32 %v42, %v486
  %v488 = vand.u32 %v487, 4294901760
  %489 = vmatpush1.msra.mxu0 %v488
  %490 = vmatprep.subr.mxu0 0.0
  %v491 = vand.u32 %v41, 4294901760
  %v492 = vsub.f32 %v41, %v491
  %v493 = vand.u32 %v492, 4294901760
  %494 = vmatpush1.msra.mxu0 %v493
  %495 = vmatprep.subr.mxu0 0.0
  %v496 = vand.u32 %v40, 4294901760
  %v497 = vsub.f32 %v40, %v496
  %v498 = vand.u32 %v497, 4294901760
  %499 = vmatpush1.msra.mxu0 %v498
  %500 = vmatprep.subr.mxu0 0.0
  %v501 = vand.u32 %v39, 4294901760
  %v502 = vsub.f32 %v39, %v501
  %v503 = vand.u32 %v502, 4294901760
  %504 = vmatpush1.msra.mxu0 %v503
  %505 = vmatprep.subr.mxu0 0.0
  %v506 = vand.u32 %v38, 4294901760
  %v507 = vsub.f32 %v38, %v506
  %v508 = vand.u32 %v507, 4294901760
  %509 = vmatpush1.msra.mxu0 %v508
  %510 = vmatprep.subr.mxu0 0.0
  %v511 = vand.u32 %v37, 4294901760
  %v512 = vsub.f32 %v37, %v511
  %v513 = vand.u32 %v512, 4294901760
  %514 = vmatpush1.msra.mxu0 %v513
  %515 = vmatprep.subr.mxu0 0.0
  %v516 = vand.u32 %v36, 4294901760
  %v517 = vsub.f32 %v36, %v516
  %v518 = vand.u32 %v517, 4294901760
  %519 = vmatpush1.msra.mxu0 %v518
  %520 = vmatprep.subr.mxu0 0.0
  %v521 = vand.u32 %v35, 4294901760
  %v522 = vsub.f32 %v35, %v521
  %v523 = vand.u32 %v522, 4294901760
  %524 = vmatpush1.msra.mxu0 %v523
  %525 = vmatprep.subr.mxu0 0.0
  %v526 = vand.u32 %v34, 4294901760
  %v527 = vsub.f32 %v34, %v526
  %v528 = vand.u32 %v527, 4294901760
  %529 = vmatpush1.msra.mxu0 %v528
  %530 = vmatprep.subr.mxu0 0.0
  %v531 = vand.u32 %v33, 4294901760
  %v532 = vsub.f32 %v33, %v531
  %v533 = vand.u32 %v532, 4294901760
  %534 = vmatpush1.msra.mxu0 %v533
  %535 = vmatprep.subr.mxu0 0.0
  %v536 = vand.u32 %v32, 4294901760
  %v537 = vsub.f32 %v32, %v536
  %v538 = vand.u32 %v537, 4294901760
  %539 = vmatpush1.msra.mxu0 %v538
  %540 = vmatprep.subr.mxu0 0.0
  %v541 = vand.u32 %v31, 4294901760
  %v542 = vsub.f32 %v31, %v541
  %v543 = vand.u32 %v542, 4294901760
  %544 = vmatpush1.msra.mxu0 %v543
  %545 = vmatprep.subr.mxu0 0.0
  %v546 = vand.u32 %v30, 4294901760
  %v547 = vsub.f32 %v30, %v546
  %v548 = vand.u32 %v547, 4294901760
  %549 = vmatpush1.msra.mxu0 %v548
  %550 = vmatprep.subr.mxu0 0.0
  %v551 = vand.u32 %v29, 4294901760
  %v552 = vsub.f32 %v29, %v551
  %v553 = vand.u32 %v552, 4294901760
  %554 = vmatpush1.msra.mxu0 %v553
  %555 = vmatprep.subr.mxu0 0.0
  %v556 = vand.u32 %v28, 4294901760
  %v557 = vsub.f32 %v28, %v556
  %v558 = vand.u32 %v557, 4294901760
  %559 = vmatpush1.msra.mxu0 %v558
  %560 = vmatprep.subr.mxu0 0.0
  %v561 = vand.u32 %v27, 4294901760
  %v562 = vsub.f32 %v27, %v561
  %v563 = vand.u32 %v562, 4294901760
  %564 = vmatpush1.msra.mxu0 %v563
  %565 = vmatprep.subr.mxu0 0.0
  %566 = vmatpush2.msra.mxu0 0.0
  %567 = vmatprep.subr.mxu0 0.0
  %568 = vmatpush2.msra.mxu0 0.0
  %569 = vmatprep.subr.mxu0 0.0
  %570 = vmatpush2.msra.mxu0 0.0
  %571 = vmatprep.subr.mxu0 0.0
  %572 = vmatpush2.msra.mxu0 0.0
  %573 = vmatprep.subr.mxu0 0.0
  %574 = vmatpush2.msra.mxu0 0.0
  %575 = vmatprep.subr.mxu0 0.0
  %576 = vmatpush2.msra.mxu0 0.0
  %577 = vmatprep.subr.mxu0 0.0
  %578 = vmatpush2.msra.mxu0 0.0
  %579 = vmatprep.subr.mxu0 0.0
  %580 = vmatpush2.msra.mxu0 0.0
  %581 = vmatprep.subr.mxu0 0.0
  %582 = vmatpush2.msra.mxu0 0.0
  %583 = vmatprep.subr.mxu0 0.0
  %584 = vmatpush2.msra.mxu0 0.0
  %585 = vmatprep.subr.mxu0 0.0
  %586 = vmatpush2.msra.mxu0 0.0
  %587 = vmatprep.subr.mxu0 0.0
  %588 = vmatpush2.msra.mxu0 0.0
  %589 = vmatprep.subr.mxu0 0.0
  %590 = vmatpush2.msra.mxu0 0.0
  %591 = vmatprep.subr.mxu0 0.0
  %592 = vmatpush2.msra.mxu0 0.0
  %593 = vmatprep.subr.mxu0 0.0
  %594 = vmatpush2.msra.mxu0 0.0
  %595 = vmatprep.subr.mxu0 0.0
  %596 = vmatpush2.msra.mxu0 0.0
  %597 = vmatprep.mubr.f32.mxu0 0.0
  %v598 = vand.u32 %v26, 4294901760
  %599 = vmatmul.mubr.f32.gmra.mxu0 %v598
  %v600 = vpop.f32.mrf.mxu0
  %v601 = vadd.f32 %v482, %v600
  %v602 = vpop.f32.mrf.mxu0
  %603 = vdwg.mxu0
  %604 = vmatprep.subr.mxu0 0.0
  %v605 = vand.u32 %v42, 4294901760
  %606 = vmatpush1.msra.mxu0 %v605
  %607 = vmatprep.subr.mxu0 0.0
  %v608 = vand.u32 %v41, 4294901760
  %609 = vmatpush1.msra.mxu0 %v608
  %610 = vmatprep.subr.mxu0 0.0
  %v611 = vand.u32 %v40, 4294901760
  %612 = vmatpush1.msra.mxu0 %v611
  %613 = vmatprep.subr.mxu0 0.0
  %v614 = vand.u32 %v39, 4294901760
  %615 = vmatpush1.msra.mxu0 %v614
  %616 = vmatprep.subr.mxu0 0.0
  %v617 = vand.u32 %v38, 4294901760
  %618 = vmatpush1.msra.mxu0 %v617
  %619 = vmatprep.subr.mxu0 0.0
  %v620 = vand.u32 %v37, 4294901760
  %621 = vmatpush1.msra.mxu0 %v620
  %622 = vmatprep.subr.mxu0 0.0
  %v623 = vand.u32 %v36, 4294901760
  %624 = vmatpush1.msra.mxu0 %v623
  %625 = vmatprep.subr.mxu0 0.0
  %v626 = vand.u32 %v35, 4294901760
  %627 = vmatpush1.msra.mxu0 %v626
  %628 = vmatprep.subr.mxu0 0.0
  %v629 = vand.u32 %v34, 4294901760
  %630 = vmatpush1.msra.mxu0 %v629
  %631 = vmatprep.subr.mxu0 0.0
  %v632 = vand.u32 %v33, 4294901760
  %633 = vmatpush1.msra.mxu0 %v632
  %634 = vmatprep.subr.mxu0 0.0
  %v635 = vand.u32 %v32, 4294901760
  %636 = vmatpush1.msra.mxu0 %v635
  %637 = vmatprep.subr.mxu0 0.0
  %v638 = vand.u32 %v31, 4294901760
  %639 = vmatpush1.msra.mxu0 %v638
  %640 = vmatprep.subr.mxu0 0.0
  %v641 = vand.u32 %v30, 4294901760
  %642 = vmatpush1.msra.mxu0 %v641
  %643 = vmatprep.subr.mxu0 0.0
  %v644 = vand.u32 %v29, 4294901760
  %645 = vmatpush1.msra.mxu0 %v644
  %646 = vmatprep.subr.mxu0 0.0
  %v647 = vand.u32 %v28, 4294901760
  %648 = vmatpush1.msra.mxu0 %v647
  %649 = vmatprep.subr.mxu0 0.0
  %v650 = vand.u32 %v27, 4294901760
  %651 = vmatpush1.msra.mxu0 %v650
  %652 = vmatprep.subr.mxu0 0.0
  %653 = vmatpush2.msra.mxu0 0.0
  %654 = vmatprep.subr.mxu0 0.0
  %655 = vmatpush2.msra.mxu0 0.0
  %656 = vmatprep.subr.mxu0 0.0
  %657 = vmatpush2.msra.mxu0 0.0
  %658 = vmatprep.subr.mxu0 0.0
  %659 = vmatpush2.msra.mxu0 0.0
  %660 = vmatprep.subr.mxu0 0.0
  %661 = vmatpush2.msra.mxu0 0.0
  %662 = vmatprep.subr.mxu0 0.0
  %663 = vmatpush2.msra.mxu0 0.0
  %664 = vmatprep.subr.mxu0 0.0
  %665 = vmatpush2.msra.mxu0 0.0
  %666 = vmatprep.subr.mxu0 0.0
  %667 = vmatpush2.msra.mxu0 0.0
  %668 = vmatprep.subr.mxu0 0.0
  %669 = vmatpush2.msra.mxu0 0.0
  %670 = vmatprep.subr.mxu0 0.0
  %671 = vmatpush2.msra.mxu0 0.0
  %672 = vmatprep.subr.mxu0 0.0
  %673 = vmatpush2.msra.mxu0 0.0
  %674 = vmatprep.subr.mxu0 0.0
  %675 = vmatpush2.msra.mxu0 0.0
  %676 = vmatprep.subr.mxu0 0.0
  %677 = vmatpush2.msra.mxu0 0.0
  %678 = vmatprep.subr.mxu0 0.0
  %679 = vmatpush2.msra.mxu0 0.0
  %680 = vmatprep.subr.mxu0 0.0
  %681 = vmatpush2.msra.mxu0 0.0
  %682 = vmatprep.subr.mxu0 0.0
  %683 = vmatpush2.msra.mxu0 0.0
  %684 = vmatprep.mubr.f32.mxu0 0.0
  %v685 = vand.u32 %v26, 4294901760
  %686 = vmatmul.mubr.f32.gmra.mxu0 %v685
  %v687 = vpop.f32.mrf.mxu0
  %v688 = vadd.f32 %v601, %v687
  %v689 = vpop.f32.mrf.mxu0
  %690 = vdwg.mxu0
  %v691 = vmax.f32 %v688, 0.0
  %v692 = vld [vmem:[%s3] sm:$0xff]
  %v693 = vld [vmem:[%s3 + $0x8] sm:$0xff]
  %v694 = vld [vmem:[%s3 + $0x10] sm:$0xff]
  %v695 = vld [vmem:[%s3 + $0x18] sm:$0xff]
  %v696 = vld [vmem:[%s3 + $0x20] sm:$0xff]
  %v697 = vld [vmem:[%s3 + $0x28] sm:$0xff]
  %v698 = vld [vmem:[%s3 + $0x30] sm:$0xff]
  %v699 = vld [vmem:[%s3 + $0x38] sm:$0xff]
  %v700 = vld [vmem:[%s3 + $0x40] sm:$0xff]
  %v701 = vld [vmem:[%s3 + $0x48] sm:$0xff]
  %v702 = vld [vmem:[%s3 + $0x50] sm:$0xff]
  %v703 = vld [vmem:[%s3 + $0x58] sm:$0xff]
  %v704 = vld [vmem:[%s3 + $0x60] sm:$0xff]
  %v705 = vld [vmem:[%s3 + $0x68] sm:$0xff]
  %v706 = vld [vmem:[%s3 + $0x70] sm:$0xff]
  %v707 = vld [vmem:[%s3 + $0x78] sm:$0xff]
  %v708 = vld [vmem:[%s4] sm:$0x1]
  %v710 = vlaneseq
  %v711 = vshrl.u32 %v710, 7
  %v712 = vsub.s32 0, %v711
  %v713 = vrot.slane %v708, %v712
  %715 = vmatprep.subr.mxu0 0.0
  %v716 = vand.u32 %v707, 4294901760
  %717 = vmatpush1.msra.mxu0 %v716
  %718 = vmatprep.subr.mxu0 0.0
  %v719 = vand.u32 %v706, 4294901760
  %720 = vmatpush1.msra.mxu0 %v719
  %721 = vmatprep.subr.mxu0 0.0
  %v722 = vand.u32 %v705, 4294901760
  %723 = vmatpush1.msra.mxu0 %v722
  %724 = vmatprep.subr.mxu0 0.0
  %v725 = vand.u32 %v704, 4294901760
  %726 = vmatpush1.msra.mxu0 %v725
  %727 = vmatprep.subr.mxu0 0.0
  %v728 = vand.u32 %v703, 4294901760
  %729 = vmatpush1.msra.mxu0 %v728
  %730 = vmatprep.subr.mxu0 0.0
  %v731 = vand.u32 %v702, 4294901760
  %732 = vmatpush1.msra.mxu0 %v731
  %733 = vmatprep.subr.mxu0 0.0
  %v734 = vand.u32 %v701, 4294901760
  %735 = vmatpush1.msra.mxu0 %v734
  %736 = vmatprep.subr.mxu0 0.0
  %v737 = vand.u32 %v700, 4294901760
  %738 = vmatpush1.msra.mxu0 %v737
  %739 = vmatprep.subr.mxu0 0.0
  %v740 = vand.u32 %v699, 4294901760
  %741 = vmatpush1.msra.mxu0 %v740
  %742 = vmatprep.subr.mxu0 0.0
  %v743 = vand.u32 %v698, 4294901760
  %744 = vmatpush1.msra.mxu0 %v743
  %745 = vmatprep.subr.mxu0 0.0
  %v746 = vand.u32 %v697, 4294901760
  %747 = vmatpush1.msra.mxu0 %v746
  %748 = vmatprep.subr.mxu0 0.0
  %v749 = vand.u32 %v696, 4294901760
  %750 = vmatpush1.msra.mxu0 %v749
  %751 = vmatprep.subr.mxu0 0.0
  %v752 = vand.u32 %v695, 4294901760
  %753 = vmatpush1.msra.mxu0 %v752
  %754 = vmatprep.subr.mxu0 0.0
  %v755 = vand.u32 %v694, 4294901760
  %756 = vmatpush1.msra.mxu0 %v755
  %757 = vmatprep.subr.mxu0 0.0
  %v758 = vand.u32 %v693, 4294901760
  %759 = vmatpush1.msra.mxu0 %v758
  %760 = vmatprep.subr.mxu0 0.0
  %v761 = vand.u32 %v692, 4294901760
  %762 = vmatpush1.msra.mxu0 %v761
  %763 = vmatprep.subr.mxu0 0.0
  %764 = vmatpush2.msra.mxu0 0.0
  %765 = vmatprep.subr.mxu0 0.0
  %766 = vmatpush2.msra.mxu0 0.0
  %767 = vmatprep.subr.mxu0 0.0
  %768 = vmatpush2.msra.mxu0 0.0
  %769 = vmatprep.subr.mxu0 0.0
  %770 = vmatpush2.msra.mxu0 0.0
  %771 = vmatprep.subr.mxu0 0.0
  %772 = vmatpush2.msra.mxu0 0.0
  %773 = vmatprep.subr.mxu0 0.0
  %774 = vmatpush2.msra.mxu0 0.0
  %775 = vmatprep.subr.mxu0 0.0
  %776 = vmatpush2.msra.mxu0 0.0
  %777 = vmatprep.subr.mxu0 0.0
  %778 = vmatpush2.msra.mxu0 0.0
  %779 = vmatprep.subr.mxu0 0.0
  %780 = vmatpush2.msra.mxu0 0.0
  %781 = vmatprep.subr.mxu0 0.0
  %782 = vmatpush2.msra.mxu0 0.0
  %783 = vmatprep.subr.mxu0 0.0
  %784 = vmatpush2.msra.mxu0 0.0
  %785 = vmatprep.subr.mxu0 0.0
  %786 = vmatpush2.msra.mxu0 0.0
  %787 = vmatprep.subr.mxu0 0.0
  %788 = vmatpush2.msra.mxu0 0.0
  %789 = vmatprep.subr.mxu0 0.0
  %790 = vmatpush2.msra.mxu0 0.0
  %791 = vmatprep.subr.mxu0 0.0
  %792 = vmatpush2.msra.mxu0 0.0
  %793 = vmatprep.subr.mxu0 0.0
  %794 = vmatpush2.msra.mxu0 0.0
  %795 = vmatprep.mubr.f32.mxu0 0.0
  %v796 = vand.u32 %v691, 4294901760
  %v797 = vsub.f32 %v691, %v796
  %v798 = vand.u32 %v797, 4294901760
  %v799 = vsub.f32 %v797, %v798
  %v800 = vand.u32 %v799, 4294901760
  %801 = vmatmul.mubr.f32.gmra.mxu0 %v800
  %v802 = vpop.f32.mrf.mxu0
  %v803 = vadd.f32 %v713, %v802
  %v804 = vpop.f32.mrf.mxu0
  %805 = vdwg.mxu0
  %806 = vmatprep.subr.mxu0 0.0
  %v807 = vand.u32 %v707, 4294901760
  %v808 = vsub.f32 %v707, %v807
  %v809 = vand.u32 %v808, 4294901760
  %v810 = vsub.f32 %v808, %v809
  %v811 = vand.u32 %v810, 4294901760
  %812 = vmatpush1.msra.mxu0 %v811
  %813 = vmatprep.subr.mxu0 0.0
  %v814 = vand.u32 %v706, 4294901760
  %v815 = vsub.f32 %v706, %v814
  %v816 = vand.u32 %v815, 4294901760
  %v817 = vsub.f32 %v815, %v816
  %v818 = vand.u32 %v817, 4294901760
  %819 = vmatpush1.msra.mxu0 %v818
  %820 = vmatprep.subr.mxu0 0.0
  %v821 = vand.u32 %v705, 4294901760
  %v822 = vsub.f32 %v705, %v821
  %v823 = vand.u32 %v822, 4294901760
  %v824 = vsub.f32 %v822, %v823
  %v825 = vand.u32 %v824, 4294901760
  %826 = vmatpush1.msra.mxu0 %v825
  %827 = vmatprep.subr.mxu0 0.0
  %v828 = vand.u32 %v704, 4294901760
  %v829 = vsub.f32 %v704, %v828
  %v830 = vand.u32 %v829, 4294901760
  %v831 = vsub.f32 %v829, %v830
  %v832 = vand.u32 %v831, 4294901760
  %833 = vmatpush1.msra.mxu0 %v832
  %834 = vmatprep.subr.mxu0 0.0
  %v835 = vand.u32 %v703, 4294901760
  %v836 = vsub.f32 %v703, %v835
  %v837 = vand.u32 %v836, 4294901760
  %v838 = vsub.f32 %v836, %v837
  %v839 = vand.u32 %v838, 4294901760
  %840 = vmatpush1.msra.mxu0 %v839
  %841 = vmatprep.subr.mxu0 0.0
  %v842 = vand.u32 %v702, 4294901760
  %v843 = vsub.f32 %v702, %v842
  %v844 = vand.u32 %v843, 4294901760
  %v845 = vsub.f32 %v843, %v844
  %v846 = vand.u32 %v845, 4294901760
  %847 = vmatpush1.msra.mxu0 %v846
  %848 = vmatprep.subr.mxu0 0.0
  %v849 = vand.u32 %v701, 4294901760
  %v850 = vsub.f32 %v701, %v849
  %v851 = vand.u32 %v850, 4294901760
  %v852 = vsub.f32 %v850, %v851
  %v853 = vand.u32 %v852, 4294901760
  %854 = vmatpush1.msra.mxu0 %v853
  %855 = vmatprep.subr.mxu0 0.0
  %v856 = vand.u32 %v700, 4294901760
  %v857 = vsub.f32 %v700, %v856
  %v858 = vand.u32 %v857, 4294901760
  %v859 = vsub.f32 %v857, %v858
  %v860 = vand.u32 %v859, 4294901760
  %861 = vmatpush1.msra.mxu0 %v860
  %862 = vmatprep.subr.mxu0 0.0
  %v863 = vand.u32 %v699, 4294901760
  %v864 = vsub.f32 %v699, %v863
  %v865 = vand.u32 %v864, 4294901760
  %v866 = vsub.f32 %v864, %v865
  %v867 = vand.u32 %v866, 4294901760
  %868 = vmatpush1.msra.mxu0 %v867
  %869 = vmatprep.subr.mxu0 0.0
  %v870 = vand.u32 %v698, 4294901760
  %v871 = vsub.f32 %v698, %v870
  %v872 = vand.u32 %v871, 4294901760
  %v873 = vsub.f32 %v871, %v872
  %v874 = vand.u32 %v873, 4294901760
  %875 = vmatpush1.msra.mxu0 %v874
  %876 = vmatprep.subr.mxu0 0.0
  %v877 = vand.u32 %v697, 4294901760
  %v878 = vsub.f32 %v697, %v877
  %v879 = vand.u32 %v878, 4294901760
  %v880 = vsub.f32 %v878, %v879
  %v881 = vand.u32 %v880, 4294901760
  %882 = vmatpush1.msra.mxu0 %v881
  %883 = vmatprep.subr.mxu0 0.0
  %v884 = vand.u32 %v696, 4294901760
  %v885 = vsub.f32 %v696, %v884
  %v886 = vand.u32 %v885, 4294901760
  %v887 = vsub.f32 %v885, %v886
  %v888 = vand.u32 %v887, 4294901760
  %889 = vmatpush1.msra.mxu0 %v888
  %890 = vmatprep.subr.mxu0 0.0
  %v891 = vand.u32 %v695, 4294901760
  %v892 = vsub.f32 %v695, %v891
  %v893 = vand.u32 %v892, 4294901760
  %v894 = vsub.f32 %v892, %v893
  %v895 = vand.u32 %v894, 4294901760
  %896 = vmatpush1.msra.mxu0 %v895
  %897 = vmatprep.subr.mxu0 0.0
  %v898 = vand.u32 %v694, 4294901760
  %v899 = vsub.f32 %v694, %v898
  %v900 = vand.u32 %v899, 4294901760
  %v901 = vsub.f32 %v899, %v900
  %v902 = vand.u32 %v901, 4294901760
  %903 = vmatpush1.msra.mxu0 %v902
  %904 = vmatprep.subr.mxu0 0.0
  %v905 = vand.u32 %v693, 4294901760
  %v906 = vsub.f32 %v693, %v905
  %v907 = vand.u32 %v906, 4294901760
  %v908 = vsub.f32 %v906, %v907
  %v909 = vand.u32 %v908, 4294901760
  %910 = vmatpush1.msra.mxu0 %v909
  %911 = vmatprep.subr.mxu0 0.0
  %v912 = vand.u32 %v692, 4294901760
  %v913 = vsub.f32 %v692, %v912
  %v914 = vand.u32 %v913, 4294901760
  %v915 = vsub.f32 %v913, %v914
  %v916 = vand.u32 %v915, 4294901760
  %917 = vmatpush1.msra.mxu0 %v916
  %918 = vmatprep.subr.mxu0 0.0
  %919 = vmatpush2.msra.mxu0 0.0
  %920 = vmatprep.subr.mxu0 0.0
  %921 = vmatpush2.msra.mxu0 0.0
  %922 = vmatprep.subr.mxu0 0.0
  %923 = vmatpush2.msra.mxu0 0.0
  %924 = vmatprep.subr.mxu0 0.0
  %925 = vmatpush2.msra.mxu0 0.0
  %926 = vmatprep.subr.mxu0 0.0
  %927 = vmatpush2.msra.mxu0 0.0
  %928 = vmatprep.subr.mxu0 0.0
  %929 = vmatpush2.msra.mxu0 0.0
  %930 = vmatprep.subr.mxu0 0.0
  %931 = vmatpush2.msra.mxu0 0.0
  %932 = vmatprep.subr.mxu0 0.0
  %933 = vmatpush2.msra.mxu0 0.0
  %934 = vmatprep.subr.mxu0 0.0
  %935 = vmatpush2.msra.mxu0 0.0
  %936 = vmatprep.subr.mxu0 0.0
  %937 = vmatpush2.msra.mxu0 0.0
  %938 = vmatprep.subr.mxu0 0.0
  %939 = vmatpush2.msra.mxu0 0.0
  %940 = vmatprep.subr.mxu0 0.0
  %941 = vmatpush2.msra.mxu0 0.0
  %942 = vmatprep.subr.mxu0 0.0
  %943 = vmatpush2.msra.mxu0 0.0
  %944 = vmatprep.subr.mxu0 0.0
  %945 = vmatpush2.msra.mxu0 0.0
  %946 = vmatprep.subr.mxu0 0.0
  %947 = vmatpush2.msra.mxu0 0.0
  %948 = vmatprep.subr.mxu0 0.0
  %949 = vmatpush2.msra.mxu0 0.0
  %950 = vmatprep.mubr.f32.mxu0 0.0
  %v951 = vand.u32 %v691, 4294901760
  %952 = vmatmul.mubr.f32.gmra.mxu0 %v951
  %v953 = vpop.f32.mrf.mxu0
  %v954 = vadd.f32 %v803, %v953
  %v955 = vpop.f32.mrf.mxu0
  %956 = vdwg.mxu0
  %957 = vmatprep.subr.mxu0 0.0
  %v958 = vand.u32 %v707, 4294901760
  %v959 = vsub.f32 %v707, %v958
  %960 = vmatpush1.msra.mxu0 %v959
  %961 = vmatprep.subr.mxu0 0.0
  %v962 = vand.u32 %v706, 4294901760
  %v963 = vsub.f32 %v706, %v962
  %964 = vmatpush1.msra.mxu0 %v963
  %965 = vmatprep.subr.mxu0 0.0
  %v966 = vand.u32 %v705, 4294901760
  %v967 = vsub.f32 %v705, %v966
  %968 = vmatpush1.msra.mxu0 %v967
  %969 = vmatprep.subr.mxu0 0.0
  %v970 = vand.u32 %v704, 4294901760
  %v971 = vsub.f32 %v704, %v970
  %972 = vmatpush1.msra.mxu0 %v971
  %973 = vmatprep.subr.mxu0 0.0
  %v974 = vand.u32 %v703, 4294901760
  %v975 = vsub.f32 %v703, %v974
  %976 = vmatpush1.msra.mxu0 %v975
  %977 = vmatprep.subr.mxu0 0.0
  %v978 = vand.u32 %v702, 4294901760
  %v979 = vsub.f32 %v702, %v978
  %980 = vmatpush1.msra.mxu0 %v979
  %981 = vmatprep.subr.mxu0 0.0
  %v982 = vand.u32 %v701, 4294901760
  %v983 = vsub.f32 %v701, %v982
  %984 = vmatpush1.msra.mxu0 %v983
  %985 = vmatprep.subr.mxu0 0.0
  %v986 = vand.u32 %v700, 4294901760
  %v987 = vsub.f32 %v700, %v986
  %988 = vmatpush1.msra.mxu0 %v987
  %989 = vmatprep.subr.mxu0 0.0
  %v990 = vand.u32 %v699, 4294901760
  %v991 = vsub.f32 %v699, %v990
  %992 = vmatpush1.msra.mxu0 %v991
  %993 = vmatprep.subr.mxu0 0.0
  %v994 = vand.u32 %v698, 4294901760
  %v995 = vsub.f32 %v698, %v994
  %996 = vmatpush1.msra.mxu0 %v995
  %997 = vmatprep.subr.mxu0 0.0
  %v998 = vand.u32 %v697, 4294901760
  %v999 = vsub.f32 %v697, %v998
  %1000 = vmatpush1.msra.mxu0 %v999
  %1001 = vmatprep.subr.mxu0 0.0
  %v1002 = vand.u32 %v696, 4294901760
  %v1003 = vsub.f32 %v696, %v1002
  %1004 = vmatpush1.msra.mxu0 %v1003
  %1005 = vmatprep.subr.mxu0 0.0
  %v1006 = vand.u32 %v695, 4294901760
  %v1007 = vsub.f32 %v695, %v1006
  %1008 = vmatpush1.msra.mxu0 %v1007
  %1009 = vmatprep.subr.mxu0 0.0
  %v1010 = vand.u32 %v694, 4294901760
  %v1011 = vsub.f32 %v694, %v1010
  %1012 = vmatpush1.msra.mxu0 %v1011
  %1013 = vmatprep.subr.mxu0 0.0
  %v1014 = vand.u32 %v693, 4294901760
  %v1015 = vsub.f32 %v693, %v1014
  %1016 = vmatpush1.msra.mxu0 %v1015
  %1017 = vmatprep.subr.mxu0 0.0
  %v1018 = vand.u32 %v692, 4294901760
  %v1019 = vsub.f32 %v692, %v1018
  %1020 = vmatpush1.msra.mxu0 %v1019
  %1021 = vmatprep.subr.mxu0 0.0
  %1022 = vmatpush2.msra.mxu0 0.0
  %1023 = vmatprep.subr.mxu0 0.0
  %1024 = vmatpush2.msra.mxu0 0.0
  %1025 = vmatprep.subr.mxu0 0.0
  %1026 = vmatpush2.msra.mxu0 0.0
  %1027 = vmatprep.subr.mxu0 0.0
  %1028 = vmatpush2.msra.mxu0 0.0
  %1029 = vmatprep.subr.mxu0 0.0
  %1030 = vmatpush2.msra.mxu0 0.0
  %1031 = vmatprep.subr.mxu0 0.0
  %1032 = vmatpush2.msra.mxu0 0.0
  %1033 = vmatprep.subr.mxu0 0.0
  %1034 = vmatpush2.msra.mxu0 0.0
  %1035 = vmatprep.subr.mxu0 0.0
  %1036 = vmatpush2.msra.mxu0 0.0
  %1037 = vmatprep.subr.mxu0 0.0
  %1038 = vmatpush2.msra.mxu0 0.0
  %1039 = vmatprep.subr.mxu0 0.0
  %1040 = vmatpush2.msra.mxu0 0.0
  %1041 = vmatprep.subr.mxu0 0.0
  %1042 = vmatpush2.msra.mxu0 0.0
  %1043 = vmatprep.subr.mxu0 0.0
  %1044 = vmatpush2.msra.mxu0 0.0
  %1045 = vmatprep.subr.mxu0 0.0
  %1046 = vmatpush2.msra.mxu0 0.0
  %1047 = vmatprep.subr.mxu0 0.0
  %1048 = vmatpush2.msra.mxu0 0.0
  %1049 = vmatprep.subr.mxu0 0.0
  %1050 = vmatpush2.msra.mxu0 0.0
  %1051 = vmatprep.subr.mxu0 0.0
  %1052 = vmatpush2.msra.mxu0 0.0
  %1053 = vmatprep.mubr.f32.mxu0 0.0
  %v1054 = vand.u32 %v691, 4294901760
  %v1055 = vsub.f32 %v691, %v1054
  %1056 = vmatmul.mubr.f32.gmra.mxu0 %v1055
  %v1057 = vpop.f32.mrf.mxu0
  %v1058 = vadd.f32 %v954, %v1057
  %v1059 = vpop.f32.mrf.mxu0
  %1060 = vdwg.mxu0
  %1061 = vmatprep.subr.mxu0 0.0
  %v1062 = vand.u32 %v707, 4294901760
  %1063 = vmatpush1.msra.mxu0 %v1062
  %1064 = vmatprep.subr.mxu0 0.0
  %v1065 = vand.u32 %v706, 4294901760
  %1066 = vmatpush1.msra.mxu0 %v1065
  %1067 = vmatprep.subr.mxu0 0.0
  %v1068 = vand.u32 %v705, 4294901760
  %1069 = vmatpush1.msra.mxu0 %v1068
  %1070 = vmatprep.subr.mxu0 0.0
  %v1071 = vand.u32 %v704, 4294901760
  %1072 = vmatpush1.msra.mxu0 %v1071
  %1073 = vmatprep.subr.mxu0 0.0
  %v1074 = vand.u32 %v703, 4294901760
  %1075 = vmatpush1.msra.mxu0 %v1074
  %1076 = vmatprep.subr.mxu0 0.0
  %v1077 = vand.u32 %v702, 4294901760
  %1078 = vmatpush1.msra.mxu0 %v1077
  %1079 = vmatprep.subr.mxu0 0.0
  %v1080 = vand.u32 %v701, 4294901760
  %1081 = vmatpush1.msra.mxu0 %v1080
  %1082 = vmatprep.subr.mxu0 0.0
  %v1083 = vand.u32 %v700, 4294901760
  %1084 = vmatpush1.msra.mxu0 %v1083
  %1085 = vmatprep.subr.mxu0 0.0
  %v1086 = vand.u32 %v699, 4294901760
  %1087 = vmatpush1.msra.mxu0 %v1086
  %1088 = vmatprep.subr.mxu0 0.0
  %v1089 = vand.u32 %v698, 4294901760
  %1090 = vmatpush1.msra.mxu0 %v1089
  %1091 = vmatprep.subr.mxu0 0.0
  %v1092 = vand.u32 %v697, 4294901760
  %1093 = vmatpush1.msra.mxu0 %v1092
  %1094 = vmatprep.subr.mxu0 0.0
  %v1095 = vand.u32 %v696, 4294901760
  %1096 = vmatpush1.msra.mxu0 %v1095
  %1097 = vmatprep.subr.mxu0 0.0
  %v1098 = vand.u32 %v695, 4294901760
  %1099 = vmatpush1.msra.mxu0 %v1098
  %1100 = vmatprep.subr.mxu0 0.0
  %v1101 = vand.u32 %v694, 4294901760
  %1102 = vmatpush1.msra.mxu0 %v1101
  %1103 = vmatprep.subr.mxu0 0.0
  %v1104 = vand.u32 %v693, 4294901760
  %1105 = vmatpush1.msra.mxu0 %v1104
  %1106 = vmatprep.subr.mxu0 0.0
  %v1107 = vand.u32 %v692, 4294901760
  %1108 = vmatpush1.msra.mxu0 %v1107
  %1109 = vmatprep.subr.mxu0 0.0
  %1110 = vmatpush2.msra.mxu0 0.0
  %1111 = vmatprep.subr.mxu0 0.0
  %1112 = vmatpush2.msra.mxu0 0.0
  %1113 = vmatprep.subr.mxu0 0.0
  %1114 = vmatpush2.msra.mxu0 0.0
  %1115 = vmatprep.subr.mxu0 0.0
  %1116 = vmatpush2.msra.mxu0 0.0
  %1117 = vmatprep.subr.mxu0 0.0
  %1118 = vmatpush2.msra.mxu0 0.0
  %1119 = vmatprep.subr.mxu0 0.0
  %1120 = vmatpush2.msra.mxu0 0.0
  %1121 = vmatprep.subr.mxu0 0.0
  %1122 = vmatpush2.msra.mxu0 0.0
  %1123 = vmatprep.subr.mxu0 0.0
  %1124 = vmatpush2.msra.mxu0 0.0
  %1125 = vmatprep.subr.mxu0 0.0
  %1126 = vmatpush2.msra.mxu0 0.0
  %1127 = vmatprep.subr.mxu0 0.0
  %1128 = vmatpush2.msra.mxu0 0.0
  %1129 = vmatprep.subr.mxu0 0.0
  %1130 = vmatpush2.msra.mxu0 0.0
  %1131 = vmatprep.subr.mxu0 0.0
  %1132 = vmatpush2.msra.mxu0 0.0
  %1133 = vmatprep.subr.mxu0 0.0
  %1134 = vmatpush2.msra.mxu0 0.0
  %1135 = vmatprep.subr.mxu0 0.0
  %1136 = vmatpush2.msra.mxu0 0.0
  %1137 = vmatprep.subr.mxu0 0.0
  %1138 = vmatpush2.msra.mxu0 0.0
  %1139 = vmatprep.subr.mxu0 0.0
  %1140 = vmatpush2.msra.mxu0 0.0
  %1141 = vmatprep.mubr.f32.mxu0 0.0
  %v1142 = vand.u32 %v691, 4294901760
  %v1143 = vsub.f32 %v691, %v1142
  %v1144 = vand.u32 %v1143, 4294901760
  %1145 = vmatmul.mubr.f32.gmra.mxu0 %v1144
  %v1146 = vpop.f32.mrf.mxu0
  %v1147 = vadd.f32 %v1058, %v1146
  %v1148 = vpop.f32.mrf.mxu0
  %1149 = vdwg.mxu0
  %1150 = vmatprep.subr.mxu0 0.0
  %v1151 = vand.u32 %v707, 4294901760
  %v1152 = vsub.f32 %v707, %v1151
  %v1153 = vand.u32 %v1152, 4294901760
  %1154 = vmatpush1.msra.mxu0 %v1153
  %1155 = vmatprep.subr.mxu0 0.0
  %v1156 = vand.u32 %v706, 4294901760
  %v1157 = vsub.f32 %v706, %v1156
  %v1158 = vand.u32 %v1157, 4294901760
  %1159 = vmatpush1.msra.mxu0 %v1158
  %1160 = vmatprep.subr.mxu0 0.0
  %v1161 = vand.u32 %v705, 4294901760
  %v1162 = vsub.f32 %v705, %v1161
  %v1163 = vand.u32 %v1162, 4294901760
  %1164 = vmatpush1.msra.mxu0 %v1163
  %1165 = vmatprep.subr.mxu0 0.0
  %v1166 = vand.u32 %v704, 4294901760
  %v1167 = vsub.f32 %v704, %v1166
  %v1168 = vand.u32 %v1167, 4294901760
  %1169 = vmatpush1.msra.mxu0 %v1168
  %1170 = vmatprep.subr.mxu0 0.0
  %v1171 = vand.u32 %v703, 4294901760
  %v1172 = vsub.f32 %v703, %v1171
  %v1173 = vand.u32 %v1172, 4294901760
  %1174 = vmatpush1.msra.mxu0 %v1173
  %1175 = vmatprep.subr.mxu0 0.0
  %v1176 = vand.u32 %v702, 4294901760
  %v1177 = vsub.f32 %v702, %v1176
  %v1178 = vand.u32 %v1177, 4294901760
  %1179 = vmatpush1.msra.mxu0 %v1178
  %1180 = vmatprep.subr.mxu0 0.0
  %v1181 = vand.u32 %v701, 4294901760
  %v1182 = vsub.f32 %v701, %v1181
  %v1183 = vand.u32 %v1182, 4294901760
  %1184 = vmatpush1.msra.mxu0 %v1183
  %1185 = vmatprep.subr.mxu0 0.0
  %v1186 = vand.u32 %v700, 4294901760
  %v1187 = vsub.f32 %v700, %v1186
  %v1188 = vand.u32 %v1187, 4294901760
  %1189 = vmatpush1.msra.mxu0 %v1188
  %1190 = vmatprep.subr.mxu0 0.0
  %v1191 = vand.u32 %v699, 4294901760
  %v1192 = vsub.f32 %v699, %v1191
  %v1193 = vand.u32 %v1192, 4294901760
  %1194 = vmatpush1.msra.mxu0 %v1193
  %1195 = vmatprep.subr.mxu0 0.0
  %v1196 = vand.u32 %v698, 4294901760
  %v1197 = vsub.f32 %v698, %v1196
  %v1198 = vand.u32 %v1197, 4294901760
  %1199 = vmatpush1.msra.mxu0 %v1198
  %1200 = vmatprep.subr.mxu0 0.0
  %v1201 = vand.u32 %v697, 4294901760
  %v1202 = vsub.f32 %v697, %v1201
  %v1203 = vand.u32 %v1202, 4294901760
  %1204 = vmatpush1.msra.mxu0 %v1203
  %1205 = vmatprep.subr.mxu0 0.0
  %v1206 = vand.u32 %v696, 4294901760
  %v1207 = vsub.f32 %v696, %v1206
  %v1208 = vand.u32 %v1207, 4294901760
  %1209 = vmatpush1.msra.mxu0 %v1208
  %1210 = vmatprep.subr.mxu0 0.0
  %v1211 = vand.u32 %v695, 4294901760
  %v1212 = vsub.f32 %v695, %v1211
  %v1213 = vand.u32 %v1212, 4294901760
  %1214 = vmatpush1.msra.mxu0 %v1213
  %1215 = vmatprep.subr.mxu0 0.0
  %v1216 = vand.u32 %v694, 4294901760
  %v1217 = vsub.f32 %v694, %v1216
  %v1218 = vand.u32 %v1217, 4294901760
  %1219 = vmatpush1.msra.mxu0 %v1218
  %1220 = vmatprep.subr.mxu0 0.0
  %v1221 = vand.u32 %v693, 4294901760
  %v1222 = vsub.f32 %v693, %v1221
  %v1223 = vand.u32 %v1222, 4294901760
  %1224 = vmatpush1.msra.mxu0 %v1223
  %1225 = vmatprep.subr.mxu0 0.0
  %v1226 = vand.u32 %v692, 4294901760
  %v1227 = vsub.f32 %v692, %v1226
  %v1228 = vand.u32 %v1227, 4294901760
  %1229 = vmatpush1.msra.mxu0 %v1228
  %1230 = vmatprep.subr.mxu0 0.0
  %1231 = vmatpush2.msra.mxu0 0.0
  %1232 = vmatprep.subr.mxu0 0.0
  %1233 = vmatpush2.msra.mxu0 0.0
  %1234 = vmatprep.subr.mxu0 0.0
  %1235 = vmatpush2.msra.mxu0 0.0
  %1236 = vmatprep.subr.mxu0 0.0
  %1237 = vmatpush2.msra.mxu0 0.0
  %1238 = vmatprep.subr.mxu0 0.0
  %1239 = vmatpush2.msra.mxu0 0.0
  %1240 = vmatprep.subr.mxu0 0.0
  %1241 = vmatpush2.msra.mxu0 0.0
  %1242 = vmatprep.subr.mxu0 0.0
  %1243 = vmatpush2.msra.mxu0 0.0
  %1244 = vmatprep.subr.mxu0 0.0
  %1245 = vmatpush2.msra.mxu0 0.0
  %1246 = vmatprep.subr.mxu0 0.0
  %1247 = vmatpush2.msra.mxu0 0.0
  %1248 = vmatprep.subr.mxu0 0.0
  %1249 = vmatpush2.msra.mxu0 0.0
  %1250 = vmatprep.subr.mxu0 0.0
  %1251 = vmatpush2.msra.mxu0 0.0
  %1252 = vmatprep.subr.mxu0 0.0
  %1253 = vmatpush2.msra.mxu0 0.0
  %1254 = vmatprep.subr.mxu0 0.0
  %1255 = vmatpush2.msra.mxu0 0.0
  %1256 = vmatprep.subr.mxu0 0.0
  %1257 = vmatpush2.msra.mxu0 0.0
  %1258 = vmatprep.subr.mxu0 0.0
  %1259 = vmatpush2.msra.mxu0 0.0
  %1260 = vmatprep.subr.mxu0 0.0
  %1261 = vmatpush2.msra.mxu0 0.0
  %1262 = vmatprep.mubr.f32.mxu0 0.0
  %v1263 = vand.u32 %v691, 4294901760
  %1264 = vmatmul.mubr.f32.gmra.mxu0 %v1263
  %v1265 = vpop.f32.mrf.mxu0
  %v1266 = vadd.f32 %v1147, %v1265
  %v1267 = vpop.f32.mrf.mxu0
  %1268 = vdwg.mxu0
  %1269 = vmatprep.subr.mxu0 0.0
  %v1270 = vand.u32 %v707, 4294901760
  %1271 = vmatpush1.msra.mxu0 %v1270
  %1272 = vmatprep.subr.mxu0 0.0
  %v1273 = vand.u32 %v706, 4294901760
  %1274 = vmatpush1.msra.mxu0 %v1273
  %1275 = vmatprep.subr.mxu0 0.0
  %v1276 = vand.u32 %v705, 4294901760
  %1277 = vmatpush1.msra.mxu0 %v1276
  %1278 = vmatprep.subr.mxu0 0.0
  %v1279 = vand.u32 %v704, 4294901760
  %1280 = vmatpush1.msra.mxu0 %v1279
  %1281 = vmatprep.subr.mxu0 0.0
  %v1282 = vand.u32 %v703, 4294901760
  %1283 = vmatpush1.msra.mxu0 %v1282
  %1284 = vmatprep.subr.mxu0 0.0
  %v1285 = vand.u32 %v702, 4294901760
  %1286 = vmatpush1.msra.mxu0 %v1285
  %1287 = vmatprep.subr.mxu0 0.0
  %v1288 = vand.u32 %v701, 4294901760
  %1289 = vmatpush1.msra.mxu0 %v1288
  %1290 = vmatprep.subr.mxu0 0.0
  %v1291 = vand.u32 %v700, 4294901760
  %1292 = vmatpush1.msra.mxu0 %v1291
  %1293 = vmatprep.subr.mxu0 0.0
  %v1294 = vand.u32 %v699, 4294901760
  %1295 = vmatpush1.msra.mxu0 %v1294
  %1296 = vmatprep.subr.mxu0 0.0
  %v1297 = vand.u32 %v698, 4294901760
  %1298 = vmatpush1.msra.mxu0 %v1297
  %1299 = vmatprep.subr.mxu0 0.0
  %v1300 = vand.u32 %v697, 4294901760
  %1301 = vmatpush1.msra.mxu0 %v1300
  %1302 = vmatprep.subr.mxu0 0.0
  %v1303 = vand.u32 %v696, 4294901760
  %1304 = vmatpush1.msra.mxu0 %v1303
  %1305 = vmatprep.subr.mxu0 0.0
  %v1306 = vand.u32 %v695, 4294901760
  %1307 = vmatpush1.msra.mxu0 %v1306
  %1308 = vmatprep.subr.mxu0 0.0
  %v1309 = vand.u32 %v694, 4294901760
  %1310 = vmatpush1.msra.mxu0 %v1309
  %1311 = vmatprep.subr.mxu0 0.0
  %v1312 = vand.u32 %v693, 4294901760
  %1313 = vmatpush1.msra.mxu0 %v1312
  %1314 = vmatprep.subr.mxu0 0.0
  %v1315 = vand.u32 %v692, 4294901760
  %1316 = vmatpush1.msra.mxu0 %v1315
  %1317 = vmatprep.subr.mxu0 0.0
  %1318 = vmatpush2.msra.mxu0 0.0
  %1319 = vmatprep.subr.mxu0 0.0
  %1320 = vmatpush2.msra.mxu0 0.0
  %1321 = vmatprep.subr.mxu0 0.0
  %1322 = vmatpush2.msra.mxu0 0.0
  %1323 = vmatprep.subr.mxu0 0.0
  %1324 = vmatpush2.msra.mxu0 0.0
  %1325 = vmatprep.subr.mxu0 0.0
  %1326 = vmatpush2.msra.mxu0 0.0
  %1327 = vmatprep.subr.mxu0 0.0
  %1328 = vmatpush2.msra.mxu0 0.0
  %1329 = vmatprep.subr.mxu0 0.0
  %1330 = vmatpush2.msra.mxu0 0.0
  %1331 = vmatprep.subr.mxu0 0.0
  %1332 = vmatpush2.msra.mxu0 0.0
  %1333 = vmatprep.subr.mxu0 0.0
  %1334 = vmatpush2.msra.mxu0 0.0
  %1335 = vmatprep.subr.mxu0 0.0
  %1336 = vmatpush2.msra.mxu0 0.0
  %1337 = vmatprep.subr.mxu0 0.0
  %1338 = vmatpush2.msra.mxu0 0.0
  %1339 = vmatprep.subr.mxu0 0.0
  %1340 = vmatpush2.msra.mxu0 0.0
  %1341 = vmatprep.subr.mxu0 0.0
  %1342 = vmatpush2.msra.mxu0 0.0
  %1343 = vmatprep.subr.mxu0 0.0
  %1344 = vmatpush2.msra.mxu0 0.0
  %1345 = vmatprep.subr.mxu0 0.0
  %1346 = vmatpush2.msra.mxu0 0.0
  %1347 = vmatprep.subr.mxu0 0.0
  %1348 = vmatpush2.msra.mxu0 0.0
  %1349 = vmatprep.mubr.f32.mxu0 0.0
  %v1350 = vand.u32 %v691, 4294901760
  %1351 = vmatmul.mubr.f32.gmra.mxu0 %v1350
  %v1352 = vpop.f32.mrf.mxu0
  %v1353 = vadd.f32 %v1266, %v1352
  %v1354 = vpop.f32.mrf.mxu0
  %1355 = vdwg.mxu0
  %v1356 = vmax.f32 %v1353, 0.0
  %v1357 = vld [vmem:[%s5] sm:$0xff]
  %v1358 = vld [vmem:[%s5 + $0x8] sm:$0xff]
  %v1359 = vld [vmem:[%s5 + $0x10] sm:$0xff]
  %v1360 = vld [vmem:[%s5 + $0x18] sm:$0xff]
  %v1361 = vld [vmem:[%s5 + $0x20] sm:$0xff]
  %v1362 = vld [vmem:[%s5 + $0x28] sm:$0xff]
  %v1363 = vld [vmem:[%s5 + $0x30] sm:$0xff]
  %v1364 = vld [vmem:[%s5 + $0x38] sm:$0xff]
  %v1365 = vld [vmem:[%s5 + $0x40] sm:$0xff]
  %v1366 = vld [vmem:[%s5 + $0x48] sm:$0xff]
  %v1367 = vld [vmem:[%s5 + $0x50] sm:$0xff]
  %v1368 = vld [vmem:[%s5 + $0x58] sm:$0xff]
  %v1369 = vld [vmem:[%s5 + $0x60] sm:$0xff]
  %v1370 = vld [vmem:[%s5 + $0x68] sm:$0xff]
  %v1371 = vld [vmem:[%s5 + $0x70] sm:$0xff]
  %v1372 = vld [vmem:[%s5 + $0x78] sm:$0xff]
  %v1373 = vld [vmem:[%s6] sm:$0x1]
  %v1375 = vlaneseq
  %v1376 = vshrl.u32 %v1375, 7
  %v1377 = vsub.s32 0, %v1376
  %v1378 = vrot.slane %v1373, %v1377
  %1380 = vmatprep.subr.mxu0 0.0
  %v1381 = vand.u32 %v1372, 4294901760
  %1382 = vmatpush1.msra.mxu0 %v1381
  %1383 = vmatprep.subr.mxu0 0.0
  %v1384 = vand.u32 %v1371, 4294901760
  %1385 = vmatpush1.msra.mxu0 %v1384
  %1386 = vmatprep.subr.mxu0 0.0
  %v1387 = vand.u32 %v1370, 4294901760
  %1388 = vmatpush1.msra.mxu0 %v1387
  %1389 = vmatprep.subr.mxu0 0.0
  %v1390 = vand.u32 %v1369, 4294901760
  %1391 = vmatpush1.msra.mxu0 %v1390
  %1392 = vmatprep.subr.mxu0 0.0
  %v1393 = vand.u32 %v1368, 4294901760
  %1394 = vmatpush1.msra.mxu0 %v1393
  %1395 = vmatprep.subr.mxu0 0.0
  %v1396 = vand.u32 %v1367, 4294901760
  %1397 = vmatpush1.msra.mxu0 %v1396
  %1398 = vmatprep.subr.mxu0 0.0
  %v1399 = vand.u32 %v1366, 4294901760
  %1400 = vmatpush1.msra.mxu0 %v1399
  %1401 = vmatprep.subr.mxu0 0.0
  %v1402 = vand.u32 %v1365, 4294901760
  %1403 = vmatpush1.msra.mxu0 %v1402
  %1404 = vmatprep.subr.mxu0 0.0
  %v1405 = vand.u32 %v1364, 4294901760
  %1406 = vmatpush1.msra.mxu0 %v1405
  %1407 = vmatprep.subr.mxu0 0.0
  %v1408 = vand.u32 %v1363, 4294901760
  %1409 = vmatpush1.msra.mxu0 %v1408
  %1410 = vmatprep.subr.mxu0 0.0
  %v1411 = vand.u32 %v1362, 4294901760
  %1412 = vmatpush1.msra.mxu0 %v1411
  %1413 = vmatprep.subr.mxu0 0.0
  %v1414 = vand.u32 %v1361, 4294901760
  %1415 = vmatpush1.msra.mxu0 %v1414
  %1416 = vmatprep.subr.mxu0 0.0
  %v1417 = vand.u32 %v1360, 4294901760
  %1418 = vmatpush1.msra.mxu0 %v1417
  %1419 = vmatprep.subr.mxu0 0.0
  %v1420 = vand.u32 %v1359, 4294901760
  %1421 = vmatpush1.msra.mxu0 %v1420
  %1422 = vmatprep.subr.mxu0 0.0
  %v1423 = vand.u32 %v1358, 4294901760
  %1424 = vmatpush1.msra.mxu0 %v1423
  %1425 = vmatprep.subr.mxu0 0.0
  %v1426 = vand.u32 %v1357, 4294901760
  %1427 = vmatpush1.msra.mxu0 %v1426
  %1428 = vmatprep.subr.mxu0 0.0
  %1429 = vmatpush2.msra.mxu0 0.0
  %1430 = vmatprep.subr.mxu0 0.0
  %1431 = vmatpush2.msra.mxu0 0.0
  %1432 = vmatprep.subr.mxu0 0.0
  %1433 = vmatpush2.msra.mxu0 0.0
  %1434 = vmatprep.subr.mxu0 0.0
  %1435 = vmatpush2.msra.mxu0 0.0
  %1436 = vmatprep.subr.mxu0 0.0
  %1437 = vmatpush2.msra.mxu0 0.0
  %1438 = vmatprep.subr.mxu0 0.0
  %1439 = vmatpush2.msra.mxu0 0.0
  %1440 = vmatprep.subr.mxu0 0.0
  %1441 = vmatpush2.msra.mxu0 0.0
  %1442 = vmatprep.subr.mxu0 0.0
  %1443 = vmatpush2.msra.mxu0 0.0
  %1444 = vmatprep.subr.mxu0 0.0
  %1445 = vmatpush2.msra.mxu0 0.0
  %1446 = vmatprep.subr.mxu0 0.0
  %1447 = vmatpush2.msra.mxu0 0.0
  %1448 = vmatprep.subr.mxu0 0.0
  %1449 = vmatpush2.msra.mxu0 0.0
  %1450 = vmatprep.subr.mxu0 0.0
  %1451 = vmatpush2.msra.mxu0 0.0
  %1452 = vmatprep.subr.mxu0 0.0
  %1453 = vmatpush2.msra.mxu0 0.0
  %1454 = vmatprep.subr.mxu0 0.0
  %1455 = vmatpush2.msra.mxu0 0.0
  %1456 = vmatprep.subr.mxu0 0.0
  %1457 = vmatpush2.msra.mxu0 0.0
  %1458 = vmatprep.subr.mxu0 0.0
  %1459 = vmatpush2.msra.mxu0 0.0
  %1460 = vmatprep.mubr.f32.mxu0 0.0
  %v1461 = vand.u32 %v1356, 4294901760
  %v1462 = vsub.f32 %v1356, %v1461
  %v1463 = vand.u32 %v1462, 4294901760
  %v1464 = vsub.f32 %v1462, %v1463
  %v1465 = vand.u32 %v1464, 4294901760
  %1466 = vmatmul.mubr.f32.gmra.mxu0 %v1465
  %v1467 = vpop.f32.mrf.mxu0
  %v1468 = vadd.f32 %v1378, %v1467
  %v1469 = vpop.f32.mrf.mxu0
  %1470 = vdwg.mxu0
  %1471 = vmatprep.subr.mxu0 0.0
  %v1472 = vand.u32 %v1372, 4294901760
  %v1473 = vsub.f32 %v1372, %v1472
  %v1474 = vand.u32 %v1473, 4294901760
  %v1475 = vsub.f32 %v1473, %v1474
  %v1476 = vand.u32 %v1475, 4294901760
  %1477 = vmatpush1.msra.mxu0 %v1476
  %1478 = vmatprep.subr.mxu0 0.0
  %v1479 = vand.u32 %v1371, 4294901760
  %v1480 = vsub.f32 %v1371, %v1479
  %v1481 = vand.u32 %v1480, 4294901760
  %v1482 = vsub.f32 %v1480, %v1481
  %v1483 = vand.u32 %v1482, 4294901760
  %1484 = vmatpush1.msra.mxu0 %v1483
  %1485 = vmatprep.subr.mxu0 0.0
  %v1486 = vand.u32 %v1370, 4294901760
  %v1487 = vsub.f32 %v1370, %v1486
  %v1488 = vand.u32 %v1487, 4294901760
  %v1489 = vsub.f32 %v1487, %v1488
  %v1490 = vand.u32 %v1489, 4294901760
  %1491 = vmatpush1.msra.mxu0 %v1490
  %1492 = vmatprep.subr.mxu0 0.0
  %v1493 = vand.u32 %v1369, 4294901760
  %v1494 = vsub.f32 %v1369, %v1493
  %v1495 = vand.u32 %v1494, 4294901760
  %v1496 = vsub.f32 %v1494, %v1495
  %v1497 = vand.u32 %v1496, 4294901760
  %1498 = vmatpush1.msra.mxu0 %v1497
  %1499 = vmatprep.subr.mxu0 0.0
  %v1500 = vand.u32 %v1368, 4294901760
  %v1501 = vsub.f32 %v1368, %v1500
  %v1502 = vand.u32 %v1501, 4294901760
  %v1503 = vsub.f32 %v1501, %v1502
  %v1504 = vand.u32 %v1503, 4294901760
  %1505 = vmatpush1.msra.mxu0 %v1504
  %1506 = vmatprep.subr.mxu0 0.0
  %v1507 = vand.u32 %v1367, 4294901760
  %v1508 = vsub.f32 %v1367, %v1507
  %v1509 = vand.u32 %v1508, 4294901760
  %v1510 = vsub.f32 %v1508, %v1509
  %v1511 = vand.u32 %v1510, 4294901760
  %1512 = vmatpush1.msra.mxu0 %v1511
  %1513 = vmatprep.subr.mxu0 0.0
  %v1514 = vand.u32 %v1366, 4294901760
  %v1515 = vsub.f32 %v1366, %v1514
  %v1516 = vand.u32 %v1515, 4294901760
  %v1517 = vsub.f32 %v1515, %v1516
  %v1518 = vand.u32 %v1517, 4294901760
  %1519 = vmatpush1.msra.mxu0 %v1518
  %1520 = vmatprep.subr.mxu0 0.0
  %v1521 = vand.u32 %v1365, 4294901760
  %v1522 = vsub.f32 %v1365, %v1521
  %v1523 = vand.u32 %v1522, 4294901760
  %v1524 = vsub.f32 %v1522, %v1523
  %v1525 = vand.u32 %v1524, 4294901760
  %1526 = vmatpush1.msra.mxu0 %v1525
  %1527 = vmatprep.subr.mxu0 0.0
  %v1528 = vand.u32 %v1364, 4294901760
  %v1529 = vsub.f32 %v1364, %v1528
  %v1530 = vand.u32 %v1529, 4294901760
  %v1531 = vsub.f32 %v1529, %v1530
  %v1532 = vand.u32 %v1531, 4294901760
  %1533 = vmatpush1.msra.mxu0 %v1532
  %1534 = vmatprep.subr.mxu0 0.0
  %v1535 = vand.u32 %v1363, 4294901760
  %v1536 = vsub.f32 %v1363, %v1535
  %v1537 = vand.u32 %v1536, 4294901760
  %v1538 = vsub.f32 %v1536, %v1537
  %v1539 = vand.u32 %v1538, 4294901760
  %1540 = vmatpush1.msra.mxu0 %v1539
  %1541 = vmatprep.subr.mxu0 0.0
  %v1542 = vand.u32 %v1362, 4294901760
  %v1543 = vsub.f32 %v1362, %v1542
  %v1544 = vand.u32 %v1543, 4294901760
  %v1545 = vsub.f32 %v1543, %v1544
  %v1546 = vand.u32 %v1545, 4294901760
  %1547 = vmatpush1.msra.mxu0 %v1546
  %1548 = vmatprep.subr.mxu0 0.0
  %v1549 = vand.u32 %v1361, 4294901760
  %v1550 = vsub.f32 %v1361, %v1549
  %v1551 = vand.u32 %v1550, 4294901760
  %v1552 = vsub.f32 %v1550, %v1551
  %v1553 = vand.u32 %v1552, 4294901760
  %1554 = vmatpush1.msra.mxu0 %v1553
  %1555 = vmatprep.subr.mxu0 0.0
  %v1556 = vand.u32 %v1360, 4294901760
  %v1557 = vsub.f32 %v1360, %v1556
  %v1558 = vand.u32 %v1557, 4294901760
  %v1559 = vsub.f32 %v1557, %v1558
  %v1560 = vand.u32 %v1559, 4294901760
  %1561 = vmatpush1.msra.mxu0 %v1560
  %1562 = vmatprep.subr.mxu0 0.0
  %v1563 = vand.u32 %v1359, 4294901760
  %v1564 = vsub.f32 %v1359, %v1563
  %v1565 = vand.u32 %v1564, 4294901760
  %v1566 = vsub.f32 %v1564, %v1565
  %v1567 = vand.u32 %v1566, 4294901760
  %1568 = vmatpush1.msra.mxu0 %v1567
  %1569 = vmatprep.subr.mxu0 0.0
  %v1570 = vand.u32 %v1358, 4294901760
  %v1571 = vsub.f32 %v1358, %v1570
  %v1572 = vand.u32 %v1571, 4294901760
  %v1573 = vsub.f32 %v1571, %v1572
  %v1574 = vand.u32 %v1573, 4294901760
  %1575 = vmatpush1.msra.mxu0 %v1574
  %1576 = vmatprep.subr.mxu0 0.0
  %v1577 = vand.u32 %v1357, 4294901760
  %v1578 = vsub.f32 %v1357, %v1577
  %v1579 = vand.u32 %v1578, 4294901760
  %v1580 = vsub.f32 %v1578, %v1579
  %v1581 = vand.u32 %v1580, 4294901760
  %1582 = vmatpush1.msra.mxu0 %v1581
  %1583 = vmatprep.subr.mxu0 0.0
  %1584 = vmatpush2.msra.mxu0 0.0
  %1585 = vmatprep.subr.mxu0 0.0
  %1586 = vmatpush2.msra.mxu0 0.0
  %1587 = vmatprep.subr.mxu0 0.0
  %1588 = vmatpush2.msra.mxu0 0.0
  %1589 = vmatprep.subr.mxu0 0.0
  %1590 = vmatpush2.msra.mxu0 0.0
  %1591 = vmatprep.subr.mxu0 0.0
  %1592 = vmatpush2.msra.mxu0 0.0
  %1593 = vmatprep.subr.mxu0 0.0
  %1594 = vmatpush2.msra.mxu0 0.0
  %1595 = vmatprep.subr.mxu0 0.0
  %1596 = vmatpush2.msra.mxu0 0.0
  %1597 = vmatprep.subr.mxu0 0.0
  %1598 = vmatpush2.msra.mxu0 0.0
  %1599 = vmatprep.subr.mxu0 0.0
  %1600 = vmatpush2.msra.mxu0 0.0
  %1601 = vmatprep.subr.mxu0 0.0
  %1602 = vmatpush2.msra.mxu0 0.0
  %1603 = vmatprep.subr.mxu0 0.0
  %1604 = vmatpush2.msra.mxu0 0.0
  %1605 = vmatprep.subr.mxu0 0.0
  %1606 = vmatpush2.msra.mxu0 0.0
  %1607 = vmatprep.subr.mxu0 0.0
  %1608 = vmatpush2.msra.mxu0 0.0
  %1609 = vmatprep.subr.mxu0 0.0
  %1610 = vmatpush2.msra.mxu0 0.0
  %1611 = vmatprep.subr.mxu0 0.0
  %1612 = vmatpush2.msra.mxu0 0.0
  %1613 = vmatprep.subr.mxu0 0.0
  %1614 = vmatpush2.msra.mxu0 0.0
  %1615 = vmatprep.mubr.f32.mxu0 0.0
  %v1616 = vand.u32 %v1356, 4294901760
  %1617 = vmatmul.mubr.f32.gmra.mxu0 %v1616
  %v1618 = vpop.f32.mrf.mxu0
  %v1619 = vadd.f32 %v1468, %v1618
  %v1620 = vpop.f32.mrf.mxu0
  %1621 = vdwg.mxu0
  %1622 = vmatprep.subr.mxu0 0.0
  %v1623 = vand.u32 %v1372, 4294901760
  %v1624 = vsub.f32 %v1372, %v1623
  %1625 = vmatpush1.msra.mxu0 %v1624
  %1626 = vmatprep.subr.mxu0 0.0
  %v1627 = vand.u32 %v1371, 4294901760
  %v1628 = vsub.f32 %v1371, %v1627
  %1629 = vmatpush1.msra.mxu0 %v1628
  %1630 = vmatprep.subr.mxu0 0.0
  %v1631 = vand.u32 %v1370, 4294901760
  %v1632 = vsub.f32 %v1370, %v1631
  %1633 = vmatpush1.msra.mxu0 %v1632
  %1634 = vmatprep.subr.mxu0 0.0
  %v1635 = vand.u32 %v1369, 4294901760
  %v1636 = vsub.f32 %v1369, %v1635
  %1637 = vmatpush1.msra.mxu0 %v1636
  %1638 = vmatprep.subr.mxu0 0.0
  %v1639 = vand.u32 %v1368, 4294901760
  %v1640 = vsub.f32 %v1368, %v1639
  %1641 = vmatpush1.msra.mxu0 %v1640
  %1642 = vmatprep.subr.mxu0 0.0
  %v1643 = vand.u32 %v1367, 4294901760
  %v1644 = vsub.f32 %v1367, %v1643
  %1645 = vmatpush1.msra.mxu0 %v1644
  %1646 = vmatprep.subr.mxu0 0.0
  %v1647 = vand.u32 %v1366, 4294901760
  %v1648 = vsub.f32 %v1366, %v1647
  %1649 = vmatpush1.msra.mxu0 %v1648
  %1650 = vmatprep.subr.mxu0 0.0
  %v1651 = vand.u32 %v1365, 4294901760
  %v1652 = vsub.f32 %v1365, %v1651
  %1653 = vmatpush1.msra.mxu0 %v1652
  %1654 = vmatprep.subr.mxu0 0.0
  %v1655 = vand.u32 %v1364, 4294901760
  %v1656 = vsub.f32 %v1364, %v1655
  %1657 = vmatpush1.msra.mxu0 %v1656
  %1658 = vmatprep.subr.mxu0 0.0
  %v1659 = vand.u32 %v1363, 4294901760
  %v1660 = vsub.f32 %v1363, %v1659
  %1661 = vmatpush1.msra.mxu0 %v1660
  %1662 = vmatprep.subr.mxu0 0.0
  %v1663 = vand.u32 %v1362, 4294901760
  %v1664 = vsub.f32 %v1362, %v1663
  %1665 = vmatpush1.msra.mxu0 %v1664
  %1666 = vmatprep.subr.mxu0 0.0
  %v1667 = vand.u32 %v1361, 4294901760
  %v1668 = vsub.f32 %v1361, %v1667
  %1669 = vmatpush1.msra.mxu0 %v1668
  %1670 = vmatprep.subr.mxu0 0.0
  %v1671 = vand.u32 %v1360, 4294901760
  %v1672 = vsub.f32 %v1360, %v1671
  %1673 = vmatpush1.msra.mxu0 %v1672
  %1674 = vmatprep.subr.mxu0 0.0
  %v1675 = vand.u32 %v1359, 4294901760
  %v1676 = vsub.f32 %v1359, %v1675
  %1677 = vmatpush1.msra.mxu0 %v1676
  %1678 = vmatprep.subr.mxu0 0.0
  %v1679 = vand.u32 %v1358, 4294901760
  %v1680 = vsub.f32 %v1358, %v1679
  %1681 = vmatpush1.msra.mxu0 %v1680
  %1682 = vmatprep.subr.mxu0 0.0
  %v1683 = vand.u32 %v1357, 4294901760
  %v1684 = vsub.f32 %v1357, %v1683
  %1685 = vmatpush1.msra.mxu0 %v1684
  %1686 = vmatprep.subr.mxu0 0.0
  %1687 = vmatpush2.msra.mxu0 0.0
  %1688 = vmatprep.subr.mxu0 0.0
  %1689 = vmatpush2.msra.mxu0 0.0
  %1690 = vmatprep.subr.mxu0 0.0
  %1691 = vmatpush2.msra.mxu0 0.0
  %1692 = vmatprep.subr.mxu0 0.0
  %1693 = vmatpush2.msra.mxu0 0.0
  %1694 = vmatprep.subr.mxu0 0.0
  %1695 = vmatpush2.msra.mxu0 0.0
  %1696 = vmatprep.subr.mxu0 0.0
  %1697 = vmatpush2.msra.mxu0 0.0
  %1698 = vmatprep.subr.mxu0 0.0
  %1699 = vmatpush2.msra.mxu0 0.0
  %1700 = vmatprep.subr.mxu0 0.0
  %1701 = vmatpush2.msra.mxu0 0.0
  %1702 = vmatprep.subr.mxu0 0.0
  %1703 = vmatpush2.msra.mxu0 0.0
  %1704 = vmatprep.subr.mxu0 0.0
  %1705 = vmatpush2.msra.mxu0 0.0
  %1706 = vmatprep.subr.mxu0 0.0
  %1707 = vmatpush2.msra.mxu0 0.0
  %1708 = vmatprep.subr.mxu0 0.0
  %1709 = vmatpush2.msra.mxu0 0.0
  %1710 = vmatprep.subr.mxu0 0.0
  %1711 = vmatpush2.msra.mxu0 0.0
  %1712 = vmatprep.subr.mxu0 0.0
  %1713 = vmatpush2.msra.mxu0 0.0
  %1714 = vmatprep.subr.mxu0 0.0
  %1715 = vmatpush2.msra.mxu0 0.0
  %1716 = vmatprep.subr.mxu0 0.0
  %1717 = vmatpush2.msra.mxu0 0.0
  %1718 = vmatprep.mubr.f32.mxu0 0.0
  %v1719 = vand.u32 %v1356, 4294901760
  %v1720 = vsub.f32 %v1356, %v1719
  %1721 = vmatmul.mubr.f32.gmra.mxu0 %v1720
  %v1722 = vpop.f32.mrf.mxu0
  %v1723 = vadd.f32 %v1619, %v1722
  %v1724 = vpop.f32.mrf.mxu0
  %1725 = vdwg.mxu0
  %1726 = vmatprep.subr.mxu0 0.0
  %v1727 = vand.u32 %v1372, 4294901760
  %1728 = vmatpush1.msra.mxu0 %v1727
  %1729 = vmatprep.subr.mxu0 0.0
  %v1730 = vand.u32 %v1371, 4294901760
  %1731 = vmatpush1.msra.mxu0 %v1730
  %1732 = vmatprep.subr.mxu0 0.0
  %v1733 = vand.u32 %v1370, 4294901760
  %1734 = vmatpush1.msra.mxu0 %v1733
  %1735 = vmatprep.subr.mxu0 0.0
  %v1736 = vand.u32 %v1369, 4294901760
  %1737 = vmatpush1.msra.mxu0 %v1736
  %1738 = vmatprep.subr.mxu0 0.0
  %v1739 = vand.u32 %v1368, 4294901760
  %1740 = vmatpush1.msra.mxu0 %v1739
  %1741 = vmatprep.subr.mxu0 0.0
  %v1742 = vand.u32 %v1367, 4294901760
  %1743 = vmatpush1.msra.mxu0 %v1742
  %1744 = vmatprep.subr.mxu0 0.0
  %v1745 = vand.u32 %v1366, 4294901760
  %1746 = vmatpush1.msra.mxu0 %v1745
  %1747 = vmatprep.subr.mxu0 0.0
  %v1748 = vand.u32 %v1365, 4294901760
  %1749 = vmatpush1.msra.mxu0 %v1748
  %1750 = vmatprep.subr.mxu0 0.0
  %v1751 = vand.u32 %v1364, 4294901760
  %1752 = vmatpush1.msra.mxu0 %v1751
  %1753 = vmatprep.subr.mxu0 0.0
  %v1754 = vand.u32 %v1363, 4294901760
  %1755 = vmatpush1.msra.mxu0 %v1754
  %1756 = vmatprep.subr.mxu0 0.0
  %v1757 = vand.u32 %v1362, 4294901760
  %1758 = vmatpush1.msra.mxu0 %v1757
  %1759 = vmatprep.subr.mxu0 0.0
  %v1760 = vand.u32 %v1361, 4294901760
  %1761 = vmatpush1.msra.mxu0 %v1760
  %1762 = vmatprep.subr.mxu0 0.0
  %v1763 = vand.u32 %v1360, 4294901760
  %1764 = vmatpush1.msra.mxu0 %v1763
  %1765 = vmatprep.subr.mxu0 0.0
  %v1766 = vand.u32 %v1359, 4294901760
  %1767 = vmatpush1.msra.mxu0 %v1766
  %1768 = vmatprep.subr.mxu0 0.0
  %v1769 = vand.u32 %v1358, 4294901760
  %1770 = vmatpush1.msra.mxu0 %v1769
  %1771 = vmatprep.subr.mxu0 0.0
  %v1772 = vand.u32 %v1357, 4294901760
  %1773 = vmatpush1.msra.mxu0 %v1772
  %1774 = vmatprep.subr.mxu0 0.0
  %1775 = vmatpush2.msra.mxu0 0.0
  %1776 = vmatprep.subr.mxu0 0.0
  %1777 = vmatpush2.msra.mxu0 0.0
  %1778 = vmatprep.subr.mxu0 0.0
  %1779 = vmatpush2.msra.mxu0 0.0
  %1780 = vmatprep.subr.mxu0 0.0
  %1781 = vmatpush2.msra.mxu0 0.0
  %1782 = vmatprep.subr.mxu0 0.0
  %1783 = vmatpush2.msra.mxu0 0.0
  %1784 = vmatprep.subr.mxu0 0.0
  %1785 = vmatpush2.msra.mxu0 0.0
  %1786 = vmatprep.subr.mxu0 0.0
  %1787 = vmatpush2.msra.mxu0 0.0
  %1788 = vmatprep.subr.mxu0 0.0
  %1789 = vmatpush2.msra.mxu0 0.0
  %1790 = vmatprep.subr.mxu0 0.0
  %1791 = vmatpush2.msra.mxu0 0.0
  %1792 = vmatprep.subr.mxu0 0.0
  %1793 = vmatpush2.msra.mxu0 0.0
  %1794 = vmatprep.subr.mxu0 0.0
  %1795 = vmatpush2.msra.mxu0 0.0
  %1796 = vmatprep.subr.mxu0 0.0
  %1797 = vmatpush2.msra.mxu0 0.0
  %1798 = vmatprep.subr.mxu0 0.0
  %1799 = vmatpush2.msra.mxu0 0.0
  %1800 = vmatprep.subr.mxu0 0.0
  %1801 = vmatpush2.msra.mxu0 0.0
  %1802 = vmatprep.subr.mxu0 0.0
  %1803 = vmatpush2.msra.mxu0 0.0
  %1804 = vmatprep.subr.mxu0 0.0
  %1805 = vmatpush2.msra.mxu0 0.0
  %1806 = vmatprep.mubr.f32.mxu0 0.0
  %v1807 = vand.u32 %v1356, 4294901760
  %v1808 = vsub.f32 %v1356, %v1807
  %v1809 = vand.u32 %v1808, 4294901760
  %1810 = vmatmul.mubr.f32.gmra.mxu0 %v1809
  %v1811 = vpop.f32.mrf.mxu0
  %v1812 = vadd.f32 %v1723, %v1811
  %v1813 = vpop.f32.mrf.mxu0
  %1814 = vdwg.mxu0
  %1815 = vmatprep.subr.mxu0 0.0
  %v1816 = vand.u32 %v1372, 4294901760
  %v1817 = vsub.f32 %v1372, %v1816
  %v1818 = vand.u32 %v1817, 4294901760
  %1819 = vmatpush1.msra.mxu0 %v1818
  %1820 = vmatprep.subr.mxu0 0.0
  %v1821 = vand.u32 %v1371, 4294901760
  %v1822 = vsub.f32 %v1371, %v1821
  %v1823 = vand.u32 %v1822, 4294901760
  %1824 = vmatpush1.msra.mxu0 %v1823
  %1825 = vmatprep.subr.mxu0 0.0
  %v1826 = vand.u32 %v1370, 4294901760
  %v1827 = vsub.f32 %v1370, %v1826
  %v1828 = vand.u32 %v1827, 4294901760
  %1829 = vmatpush1.msra.mxu0 %v1828
  %1830 = vmatprep.subr.mxu0 0.0
  %v1831 = vand.u32 %v1369, 4294901760
  %v1832 = vsub.f32 %v1369, %v1831
  %v1833 = vand.u32 %v1832, 4294901760
  %1834 = vmatpush1.msra.mxu0 %v1833
  %1835 = vmatprep.subr.mxu0 0.0
  %v1836 = vand.u32 %v1368, 4294901760
  %v1837 = vsub.f32 %v1368, %v1836
  %v1838 = vand.u32 %v1837, 4294901760
  %1839 = vmatpush1.msra.mxu0 %v1838
  %1840 = vmatprep.subr.mxu0 0.0
  %v1841 = vand.u32 %v1367, 4294901760
  %v1842 = vsub.f32 %v1367, %v1841
  %v1843 = vand.u32 %v1842, 4294901760
  %1844 = vmatpush1.msra.mxu0 %v1843
  %1845 = vmatprep.subr.mxu0 0.0
  %v1846 = vand.u32 %v1366, 4294901760
  %v1847 = vsub.f32 %v1366, %v1846
  %v1848 = vand.u32 %v1847, 4294901760
  %1849 = vmatpush1.msra.mxu0 %v1848
  %1850 = vmatprep.subr.mxu0 0.0
  %v1851 = vand.u32 %v1365, 4294901760
  %v1852 = vsub.f32 %v1365, %v1851
  %v1853 = vand.u32 %v1852, 4294901760
  %1854 = vmatpush1.msra.mxu0 %v1853
  %1855 = vmatprep.subr.mxu0 0.0
  %v1856 = vand.u32 %v1364, 4294901760
  %v1857 = vsub.f32 %v1364, %v1856
  %v1858 = vand.u32 %v1857, 4294901760
  %1859 = vmatpush1.msra.mxu0 %v1858
  %1860 = vmatprep.subr.mxu0 0.0
  %v1861 = vand.u32 %v1363, 4294901760
  %v1862 = vsub.f32 %v1363, %v1861
  %v1863 = vand.u32 %v1862, 4294901760
  %1864 = vmatpush1.msra.mxu0 %v1863
  %1865 = vmatprep.subr.mxu0 0.0
  %v1866 = vand.u32 %v1362, 4294901760
  %v1867 = vsub.f32 %v1362, %v1866
  %v1868 = vand.u32 %v1867, 4294901760
  %1869 = vmatpush1.msra.mxu0 %v1868
  %1870 = vmatprep.subr.mxu0 0.0
  %v1871 = vand.u32 %v1361, 4294901760
  %v1872 = vsub.f32 %v1361, %v1871
  %v1873 = vand.u32 %v1872, 4294901760
  %1874 = vmatpush1.msra.mxu0 %v1873
  %1875 = vmatprep.subr.mxu0 0.0
  %v1876 = vand.u32 %v1360, 4294901760
  %v1877 = vsub.f32 %v1360, %v1876
  %v1878 = vand.u32 %v1877, 4294901760
  %1879 = vmatpush1.msra.mxu0 %v1878
  %1880 = vmatprep.subr.mxu0 0.0
  %v1881 = vand.u32 %v1359, 4294901760
  %v1882 = vsub.f32 %v1359, %v1881
  %v1883 = vand.u32 %v1882, 4294901760
  %1884 = vmatpush1.msra.mxu0 %v1883
  %1885 = vmatprep.subr.mxu0 0.0
  %v1886 = vand.u32 %v1358, 4294901760
  %v1887 = vsub.f32 %v1358, %v1886
  %v1888 = vand.u32 %v1887, 4294901760
  %1889 = vmatpush1.msra.mxu0 %v1888
  %1890 = vmatprep.subr.mxu0 0.0
  %v1891 = vand.u32 %v1357, 4294901760
  %v1892 = vsub.f32 %v1357, %v1891
  %v1893 = vand.u32 %v1892, 4294901760
  %1894 = vmatpush1.msra.mxu0 %v1893
  %1895 = vmatprep.subr.mxu0 0.0
  %1896 = vmatpush2.msra.mxu0 0.0
  %1897 = vmatprep.subr.mxu0 0.0
  %1898 = vmatpush2.msra.mxu0 0.0
  %1899 = vmatprep.subr.mxu0 0.0
  %1900 = vmatpush2.msra.mxu0 0.0
  %1901 = vmatprep.subr.mxu0 0.0
  %1902 = vmatpush2.msra.mxu0 0.0
  %1903 = vmatprep.subr.mxu0 0.0
  %1904 = vmatpush2.msra.mxu0 0.0
  %1905 = vmatprep.subr.mxu0 0.0
  %1906 = vmatpush2.msra.mxu0 0.0
  %1907 = vmatprep.subr.mxu0 0.0
  %1908 = vmatpush2.msra.mxu0 0.0
  %1909 = vmatprep.subr.mxu0 0.0
  %1910 = vmatpush2.msra.mxu0 0.0
  %1911 = vmatprep.subr.mxu0 0.0
  %1912 = vmatpush2.msra.mxu0 0.0
  %1913 = vmatprep.subr.mxu0 0.0
  %1914 = vmatpush2.msra.mxu0 0.0
  %1915 = vmatprep.subr.mxu0 0.0
  %1916 = vmatpush2.msra.mxu0 0.0
  %1917 = vmatprep.subr.mxu0 0.0
  %1918 = vmatpush2.msra.mxu0 0.0
  %1919 = vmatprep.subr.mxu0 0.0
  %1920 = vmatpush2.msra.mxu0 0.0
  %1921 = vmatprep.subr.mxu0 0.0
  %1922 = vmatpush2.msra.mxu0 0.0
  %1923 = vmatprep.subr.mxu0 0.0
  %1924 = vmatpush2.msra.mxu0 0.0
  %1925 = vmatprep.subr.mxu0 0.0
  %1926 = vmatpush2.msra.mxu0 0.0
  %1927 = vmatprep.mubr.f32.mxu0 0.0
  %v1928 = vand.u32 %v1356, 4294901760
  %1929 = vmatmul.mubr.f32.gmra.mxu0 %v1928
  %v1930 = vpop.f32.mrf.mxu0
  %v1931 = vadd.f32 %v1812, %v1930
  %v1932 = vpop.f32.mrf.mxu0
  %1933 = vdwg.mxu0
  %1934 = vmatprep.subr.mxu0 0.0
  %v1935 = vand.u32 %v1372, 4294901760
  %1936 = vmatpush1.msra.mxu0 %v1935
  %1937 = vmatprep.subr.mxu0 0.0
  %v1938 = vand.u32 %v1371, 4294901760
  %1939 = vmatpush1.msra.mxu0 %v1938
  %1940 = vmatprep.subr.mxu0 0.0
  %v1941 = vand.u32 %v1370, 4294901760
  %1942 = vmatpush1.msra.mxu0 %v1941
  %1943 = vmatprep.subr.mxu0 0.0
  %v1944 = vand.u32 %v1369, 4294901760
  %1945 = vmatpush1.msra.mxu0 %v1944
  %1946 = vmatprep.subr.mxu0 0.0
  %v1947 = vand.u32 %v1368, 4294901760
  %1948 = vmatpush1.msra.mxu0 %v1947
  %1949 = vmatprep.subr.mxu0 0.0
  %v1950 = vand.u32 %v1367, 4294901760
  %1951 = vmatpush1.msra.mxu0 %v1950
  %1952 = vmatprep.subr.mxu0 0.0
  %v1953 = vand.u32 %v1366, 4294901760
  %1954 = vmatpush1.msra.mxu0 %v1953
  %1955 = vmatprep.subr.mxu0 0.0
  %v1956 = vand.u32 %v1365, 4294901760
  %1957 = vmatpush1.msra.mxu0 %v1956
  %1958 = vmatprep.subr.mxu0 0.0
  %v1959 = vand.u32 %v1364, 4294901760
  %1960 = vmatpush1.msra.mxu0 %v1959
  %1961 = vmatprep.subr.mxu0 0.0
  %v1962 = vand.u32 %v1363, 4294901760
  %1963 = vmatpush1.msra.mxu0 %v1962
  %1964 = vmatprep.subr.mxu0 0.0
  %v1965 = vand.u32 %v1362, 4294901760
  %1966 = vmatpush1.msra.mxu0 %v1965
  %1967 = vmatprep.subr.mxu0 0.0
  %v1968 = vand.u32 %v1361, 4294901760
  %1969 = vmatpush1.msra.mxu0 %v1968
  %1970 = vmatprep.subr.mxu0 0.0
  %v1971 = vand.u32 %v1360, 4294901760
  %1972 = vmatpush1.msra.mxu0 %v1971
  %1973 = vmatprep.subr.mxu0 0.0
  %v1974 = vand.u32 %v1359, 4294901760
  %1975 = vmatpush1.msra.mxu0 %v1974
  %1976 = vmatprep.subr.mxu0 0.0
  %v1977 = vand.u32 %v1358, 4294901760
  %1978 = vmatpush1.msra.mxu0 %v1977
  %1979 = vmatprep.subr.mxu0 0.0
  %v1980 = vand.u32 %v1357, 4294901760
  %1981 = vmatpush1.msra.mxu0 %v1980
  %1982 = vmatprep.subr.mxu0 0.0
  %1983 = vmatpush2.msra.mxu0 0.0
  %1984 = vmatprep.subr.mxu0 0.0
  %1985 = vmatpush2.msra.mxu0 0.0
  %1986 = vmatprep.subr.mxu0 0.0
  %1987 = vmatpush2.msra.mxu0 0.0
  %1988 = vmatprep.subr.mxu0 0.0
  %1989 = vmatpush2.msra.mxu0 0.0
  %1990 = vmatprep.subr.mxu0 0.0
  %1991 = vmatpush2.msra.mxu0 0.0
  %1992 = vmatprep.subr.mxu0 0.0
  %1993 = vmatpush2.msra.mxu0 0.0
  %1994 = vmatprep.subr.mxu0 0.0
  %1995 = vmatpush2.msra.mxu0 0.0
  %1996 = vmatprep.subr.mxu0 0.0
  %1997 = vmatpush2.msra.mxu0 0.0
  %1998 = vmatprep.subr.mxu0 0.0
  %1999 = vmatpush2.msra.mxu0 0.0
  %2000 = vmatprep.subr.mxu0 0.0
  %2001 = vmatpush2.msra.mxu0 0.0
  %2002 = vmatprep.subr.mxu0 0.0
  %2003 = vmatpush2.msra.mxu0 0.0
  %2004 = vmatprep.subr.mxu0 0.0
  %2005 = vmatpush2.msra.mxu0 0.0
  %2006 = vmatprep.subr.mxu0 0.0
  %2007 = vmatpush2.msra.mxu0 0.0
  %2008 = vmatprep.subr.mxu0 0.0
  %2009 = vmatpush2.msra.mxu0 0.0
  %2010 = vmatprep.subr.mxu0 0.0
  %2011 = vmatpush2.msra.mxu0 0.0
  %2012 = vmatprep.subr.mxu0 0.0
  %2013 = vmatpush2.msra.mxu0 0.0
  %2014 = vmatprep.mubr.f32.mxu0 0.0
  %v2015 = vand.u32 %v1356, 4294901760
  %2016 = vmatmul.mubr.f32.gmra.mxu0 %v2015
  %v2017 = vpop.f32.mrf.mxu0
  %v2018 = vadd.f32 %v1931, %v2017
  %v2019 = vpop.f32.mrf.mxu0
  %2020 = vdwg.mxu0
  %2021 = vst [vmem:[%s7] sm:$0xff] %v2018
  // Predicated region
  $region30: #{peak_predictor_forward.1} parent=0 // pred_check
    _
  $region31: #{peak_predictor_forward.1} parent=0 // pred_check_branch
    %2023 = sbr.rel (0) target = $region33
  $region32: #{peak_predictor_forward.1} parent=0 // pred_region
    _
  $region33: #{peak_predictor_forward.1} parent=0 // pred_fallthru
    _
  // Predicated region
  $region34: #{peak_predictor_forward.1} parent=0 // pred_check
    _
  $region35: #{peak_predictor_forward.1} parent=0 // pred_check_branch
    %2025 = sbr.rel (0) target = $region37
  $region36: #{peak_predictor_forward.1} parent=0 // pred_region
    _
  $region37: #{peak_predictor_forward.1} parent=0 // pred_fallthru
    _

</llo_original>
